<compile_context>
chip_gen: v5e
topology: v5e:2x2
jax: 0.10.0
libtpu: 0.0.40
codegen_flags: <defaults>
</compile_context>

<pallas_src>
import functools
import numpy as np

import jax
import jax.numpy as jnp
from jax.experimental import pallas as pl
from jax.experimental.pallas import tpu as pltpu


KERNEL_MUL = 2.0
KERNEL_NUM = 5
COMPUTE_DTYPE = jnp.bfloat16   # MXU-native on v6e/v7x; halves weight DMA bytes


def _sum11(x):
    return jnp.sum(jnp.sum(x, axis=1, keepdims=True), axis=0, keepdims=True)


# ----------------------------------------------------------------------------
# Fused Pallas kernel
# ----------------------------------------------------------------------------

def _deepda_fused_kernel(xs_ref, xt_ref, lab_ref, wb_ref, bb_ref, w1_ref, b1_ref,
                         wc_ref, bc_ref, loss_ref, *,
                         batch_size, num_class, kernel_mul, kernel_num):
    B = batch_size
    C = num_class
    f32 = jnp.float32

    def dot_t(a, b):      # a @ b.T with f32 accumulation on the MXU
        return jax.lax.dot_general(a, b, (((1,), (1,)), ((), ())),
                                   preferred_element_type=f32)

    def dense_path(x):    # x: (B, n_input) bf16
        # DaNN backbone: Linear -> Dropout (eval-mode identity) -> ReLU
        h = jnp.dot(x, wb_ref[...], preferred_element_type=f32) + bb_ref[...]
        h = jnp.maximum(h, 0.0)
        # bottleneck: Linear -> ReLU
        feat = jnp.dot(h.astype(COMPUTE_DTYPE), w1_ref[...],
                       preferred_element_type=f32) + b1_ref[...]
        feat = jnp.maximum(feat, 0.0)
        # classifier
        logits = jnp.dot(feat.astype(COMPUTE_DTYPE), wc_ref[...],
                         preferred_element_type=f32) + bc_ref[...]
        return feat, logits

    feat_s, src_logits = dense_path(xs_ref[...])
    feat_t, tgt_logits = dense_path(xt_ref[...])

    # one-hot labels built in-kernel from the (B,1) int32 labels (no HBM one-hot)
    cls = jax.lax.broadcasted_iota(jnp.int32, (B, C), 1)
    onehot = (cls == lab_ref[...]).astype(f32)

    # --- source cross entropy (mean) == nn.CrossEntropyLoss ------------------
    m = jnp.max(src_logits, axis=1, keepdims=True)
    lse = m + jnp.log(jnp.sum(jnp.exp(src_logits - m), axis=1, keepdims=True))
    picked = jnp.sum(onehot * src_logits, axis=1, keepdims=True)
    clf = jnp.sum(lse - picked, axis=0, keepdims=True) * (1.0 / B)        # (1,1)

    # --- target softmax (approx reciprocal -> EUP slot) ----------------------
    tm = jnp.max(tgt_logits, axis=1, keepdims=True)
    te = jnp.exp(tgt_logits - tm)
    t_prob = te * pl.reciprocal(jnp.sum(te, axis=1, keepdims=True), approx=True)

    # --- LMMDLoss.cal_weight, vectorised on device ---------------------------
    s_sum = jnp.sum(onehot, axis=0, keepdims=True)                        # (1,C)
    s_present = s_sum > 0.0
    s_w = onehot / jnp.where(s_present, s_sum, 100.0)

    t_sum = jnp.sum(t_prob, axis=0, keepdims=True)                        # (1,C)
    t_w = t_prob / jnp.where(t_sum == 0.0, 100.0, t_sum)

    # target predicted class (first argmax of the probabilities)
    row_max = jnp.max(t_prob, axis=1, keepdims=True)
    first = jnp.min(jnp.where(t_prob == row_max, cls, C), axis=1, keepdims=True)
    t_lab_onehot = (cls == first).astype(f32)
    t_present = jnp.sum(t_lab_onehot, axis=0, keepdims=True) > 0.0

    mask = jnp.logical_and(s_present, t_present).astype(f32)              # (1,C)
    count = jnp.sum(mask, axis=1, keepdims=True)
    inv_count = jnp.where(count > 0.0, 1.0 / jnp.maximum(count, 1.0), 0.0)

    s_m = s_w * mask
    w_ss = dot_t(s_m, s_w) * inv_count                                    # (B,B)
    w_tt = dot_t(t_w * mask, t_w) * inv_count
    w_st = dot_t(s_m, t_w) * inv_count

    # --- block-wise pairwise squared distances (no (2B,*) concat needed) -----
    sq_s = jnp.sum(feat_s * feat_s, axis=1, keepdims=True)                # (B,1)
    sq_t = jnp.sum(feat_t * feat_t, axis=1, keepdims=True)
    l2_ss = jnp.maximum(sq_s + sq_s.T - 2.0 * dot_t(feat_s, feat_s), 0.0)
    l2_tt = jnp.maximum(sq_t + sq_t.T - 2.0 * dot_t(feat_t, feat_t), 0.0)
    l2_st = jnp.maximum(sq_s + sq_t.T - 2.0 * dot_t(feat_s, feat_t), 0.0)

    n = 2 * B
    tot = _sum11(l2_ss) + _sum11(l2_tt) + 2.0 * _sum11(l2_st)             # (1,1)
    bw = tot * (1.0 / float(n * n - n))
    bw = bw * (1.0 / float(kernel_mul ** (kernel_num // 2)))
    inv_bw = 1.0 / bw     # single (1,1) divide: exact (approx buys nothing)
    # TODO(synk): degenerate features (bw == 0) give exp(-inf) -> zero kernels;
    # same silent hazard as upstream DeepDA, intentionally not guarded.

    # --- Gaussian multi-kernel, lane-packed: ONE exp per block ---------------
    # Replicate each (B,B) l2 block kernel_num times along the lane axis via
    # tiny MXU matmuls against iota-built selection matrices, so the exp runs
    # once on a (B, kernel_num*B) tile instead of kernel_num times.
    P = kernel_num * B
    row_i = jax.lax.broadcasted_iota(jnp.int32, (B, P), 0)
    col_i = jax.lax.broadcasted_iota(jnp.int32, (B, P), 1)
    expand = jnp.zeros((B, P), f32)          # lane block i == I
    scaled_expand = jnp.zeros((B, P), f32)   # lane block i == I * kernel_mul**-i
    for i in range(kernel_num):
        hit = (col_i == row_i + i * B).astype(f32)
        expand = expand + hit
        scaled_expand = scaled_expand + hit * float(kernel_mul ** (-i))

    def weighted_kernel_sum(l2_blk, w_blk):
        p = jnp.dot(l2_blk, scaled_expand, preferred_element_type=f32)    # (B,P)
        k = jnp.exp(-p * inv_bw)                                          # 1 exp
        wp = jnp.dot(w_blk, expand, preferred_element_type=f32)
        return _sum11(wp * k), k

    v_ss, k_ss = weighted_kernel_sum(l2_ss, w_ss)
    v_tt, k_tt = weighted_kernel_sum(l2_tt, w_tt)
    v_st, k_st = weighted_kernel_sum(l2_st, w_st)

    # upstream: if torch.sum(torch.isnan(sum(kernels))): return 0   (on device)
    nan_blk = jnp.maximum(jnp.where(jnp.isnan(k_ss), 1.0, 0.0),
                          jnp.maximum(jnp.where(jnp.isnan(k_tt), 1.0, 0.0),
                                      jnp.where(jnp.isnan(k_st), 1.0, 0.0)))
    nan_any = jnp.max(jnp.max(nan_blk, axis=1, keepdims=True),
                      axis=0, keepdims=True)                              # (1,1)

    lmmd = jnp.where(nan_any > 0.0, 0.0, v_ss + v_tt - 2.0 * v_st)        # (1,1)

    # single (1,2) output [clf_loss, lmmd_loss] -> one store, one writeback DMA
    col2 = jax.lax.broadcasted_iota(jnp.int32, (1, 2), 1)
    loss_ref[...] = jnp.where(col2 == 0, clf, lmmd)


# ----------------------------------------------------------------------------
# Wrapper
# ----------------------------------------------------------------------------

@jax.jit
def _deepda_forward(source, target, source_label, lamb, wb, bb, w1, b1, wc, bc):
    """Single device program: flatten -> fused Pallas kernel -> lamb scale."""
    B = source.shape[0]
    num_class = wc.shape[1]
    # x.view(x.size(0), -1) per domain; NO (2B,K) HBM concat (review item).
    xs = source.reshape(B, -1).astype(COMPUTE_DTYPE)
    xt = target.reshape(B, -1).astype(COMPUTE_DTYPE)
    labels = source_label.astype(jnp.int32).reshape(B, 1)

    vmem = pl.BlockSpec(memory_space=pltpu.MemorySpace.VMEM)
    losses = pl.pallas_call(
        functools.partial(_deepda_fused_kernel, batch_size=B,
                          num_class=num_class, kernel_mul=KERNEL_MUL,
                          kernel_num=KERNEL_NUM),
        out_shape=jax.ShapeDtypeStruct((1, 2), jnp.float32),
        in_specs=[vmem] * 9,
        out_specs=vmem,
        compiler_params=pltpu.CompilerParams(vmem_limit_bytes=32 * 1024 * 1024),
    )(xs, xt, labels,
      wb.astype(COMPUTE_DTYPE), bb, w1.astype(COMPUTE_DTYPE), b1,
      wc.astype(COMPUTE_DTYPE), bc)
    # lamb multiply stays inside this jit (same executable, no extra dispatch).
    return losses[0, 0], losses[0, 1] * lamb[0, 0]


# ----------------------------------------------------------------------------
# Host-side glue
# ----------------------------------------------------------------------------

class LambdaScheduler:
    def __init__(self, gamma=1.0, max_iter=1000):
        self.gamma = gamma
        self.max_iter = max_iter
        self.curr_iter = 0

    def lamb(self):
        p = self.curr_iter / self.max_iter
        return 2.0 / (1.0 + np.exp(-self.gamma * p)) - 1.0

    def step(self):
        self.curr_iter = min(self.curr_iter + 1, self.max_iter)


def init_linear(key, fan_in, fan_out):
    """torch.nn.Linear default init: U(-1/sqrt(fan_in), 1/sqrt(fan_in))."""
    kw, kb = jax.random.split(key)
    bound = 1.0 / float(np.sqrt(fan_in))
    w = jax.random.uniform(kw, (fan_in, fan_out), jnp.float32, -bound, bound)
    b = jax.random.uniform(kb, (1, fan_out), jnp.float32, -bound, bound)
    return w, b


def transfer_net_forward(params, source, target, source_label, num_class,
                         scheduler):
    """TransferNet.forward -> (clf_loss, transfer_loss); one fused device call."""
    wb, bb, w1, b1, wc, bc = params
    assert num_class == wc.shape[1]
    lamb = jnp.full((1, 1), scheduler.lamb(), jnp.float32)
    # TODO(synk): upstream skips scheduler.step() when the Gaussian kernel matrix
    # has NaNs; we step unconditionally so the NaN branch stays on-device and no
    # blocking device->host sync is needed every iteration.
    scheduler.step()
    return _deepda_forward(source, target, source_label, lamb,
                           wb, bb, w1, b1, wc, bc)


# ----------------------------------------------------------------------------
# Pure-JAX reference (sanity check for the classification path)
# ----------------------------------------------------------------------------

def _ref_clf_loss(params, source, source_label, num_class):
    """Mirrors the kernel's bf16-operand / f32-accumulate dense path."""
    wb, bb, w1, b1, wc, bc = params
    B = source.shape[0]

    def lin(x, w, b, relu):
        y = jnp.dot(x.astype(COMPUTE_DTYPE), w.astype(COMPUTE_DTYPE),
                    preferred_element_type=jnp.float32) + b
        return jnp.maximum(y, 0.0) if relu else y

    f = lin(source.reshape(B, -1), wb, bb, True)
    f = lin(f, w1, b1, True)
    logits = lin(f, wc, bc, False)
    lse = jax.scipy.special.logsumexp(logits, axis=1)
    return jnp.mean(lse - logits[jnp.arange(B), source_label])


# ----------------------------------------------------------------------------

if __name__ == "__main__":
    # TODO(synk): the pretrained ResNet/AlexNet backbones of get_backbone() need
    # torchvision weights; only the DaNN (MLP) backbone path is implemented.
    B, C, H, W = 8, 3, 16, 16          # B=8 -> each per-domain matmul fills a sublane tile
    n_input = C * H * W                # 768
    n_hidden = 64                      # DaNN backbone hidden (small)
    bottleneck_width = 64
    num_class = 8

    key = jax.random.PRNGKey(0)
    k_src, k_tgt, k_lab, k0, k1, k2 = jax.random.split(key, 6)
    source = jax.random.normal(k_src, (B, C, H, W), jnp.float32)
    target = jax.random.normal(k_tgt, (B, C, H, W), jnp.float32)
    source_label = jax.random.randint(k_lab, (B,), 0, num_class)

    wb, bb = init_linear(k0, n_input, n_hidden)            # backbone layer_input
    w1, b1 = init_linear(k1, n_hidden, bottleneck_width)   # bottleneck
    wc, bc = init_linear(k2, bottleneck_width, num_class)  # classifier
    params = (wb, bb, w1, b1, wc, bc)

    sched = LambdaScheduler(gamma=1.0, max_iter=1000)

    clf_loss, transfer_loss = transfer_net_forward(
        params, source, target, source_label, num_class, sched)
    jax.block_until_ready((clf_loss, transfer_loss))

    # sanity check against a plain-JAX reference
    clf_ref = _ref_clf_loss(params, source, source_label, num_class)
    np.testing.assert_allclose(np.asarray(clf_loss), np.asarray(clf_ref),
                               rtol=2e-2, atol=2e-2)
    # first call: LambdaScheduler.curr_iter == 0 -> lamb == 0 -> transfer_loss == 0
    np.testing.assert_allclose(np.asarray(transfer_loss), 0.0, atol=1e-6)

    # second call: lamb > 0; LMMD path must produce a finite loss
    clf2, tl2 = transfer_net_forward(
        params, source, target, source_label, num_class, sched)
    jax.block_until_ready((clf2, tl2))
    assert np.isfinite(np.asarray(clf2)) and np.isfinite(np.asarray(tl2))

    print("KERNEL_OK")
</pallas_src>

<mosaic_0001>
module attributes {stable_mosaic.version = 11 : i64} {
  func.func @_deepda_fused_kernel(%arg0: memref<8x768xbf16, #tpu.memory_space<vmem>>, %arg1: memref<8x768xbf16, #tpu.memory_space<vmem>>, %arg2: memref<8x1xi32, #tpu.memory_space<vmem>>, %arg3: memref<768x64xbf16, #tpu.memory_space<vmem>>, %arg4: memref<1x64xf32, #tpu.memory_space<vmem>>, %arg5: memref<64x64xbf16, #tpu.memory_space<vmem>>, %arg6: memref<1x64xf32, #tpu.memory_space<vmem>>, %arg7: memref<64x8xbf16, #tpu.memory_space<vmem>>, %arg8: memref<1x8xf32, #tpu.memory_space<vmem>>, %arg9: memref<1x2xf32, #tpu.memory_space<vmem>>) attributes {dimension_semantics = [], scalar_prefetch = 0 : i64, scratch_operands = 0 : i64, tpu.core_type = #tpu.core_type<tc>} {
    %c0 = arith.constant 0 : index
    %c0_0 = arith.constant 0 : index
    %0 = vector.load %arg0[%c0, %c0_0] : memref<8x768xbf16, #tpu.memory_space<vmem>>, vector<8x768xbf16>
    %c0_1 = arith.constant 0 : index
    %c0_2 = arith.constant 0 : index
    %1 = vector.load %arg3[%c0_1, %c0_2] : memref<768x64xbf16, #tpu.memory_space<vmem>>, vector<768x64xbf16>
    %cst = arith.constant dense<0.000000e+00> : vector<8x64xf32>
    %2 = tpu.matmul %0, %1, %cst {dimension_numbers = #tpu.dot_dimension_numbers<[1], [0], [0], [1], [0, 0, 1, 1], [], []>} : vector<8x768xbf16>, vector<768x64xbf16>, vector<8x64xf32> -> vector<8x64xf32>
    %c0_3 = arith.constant 0 : index
    %c0_4 = arith.constant 0 : index
    %3 = vector.load %arg4[%c0_3, %c0_4] : memref<1x64xf32, #tpu.memory_space<vmem>>, vector<1x64xf32>
    %4 = vector.broadcast %3 : vector<1x64xf32> to vector<8x64xf32>
    %5 = arith.addf %2, %4 : vector<8x64xf32>
    %cst_5 = arith.constant 0.000000e+00 : f32
    %6 = vector.broadcast %cst_5 : f32 to vector<8x64xf32>
    %7 = arith.maximumf %5, %6 : vector<8x64xf32>
    %8 = arith.truncf %7 : vector<8x64xf32> to vector<8x64xbf16>
    %c0_6 = arith.constant 0 : index
    %c0_7 = arith.constant 0 : index
    %9 = vector.load %arg5[%c0_6, %c0_7] : memref<64x64xbf16, #tpu.memory_space<vmem>>, vector<64x64xbf16>
    %cst_8 = arith.constant dense<0.000000e+00> : vector<8x64xf32>
    %10 = tpu.matmul %8, %9, %cst_8 {dimension_numbers = #tpu.dot_dimension_numbers<[1], [0], [0], [1], [0, 0, 1, 1], [], []>} : vector<8x64xbf16>, vector<64x64xbf16>, vector<8x64xf32> -> vector<8x64xf32>
    %c0_9 = arith.constant 0 : index
    %c0_10 = arith.constant 0 : index
    %11 = vector.load %arg6[%c0_9, %c0_10] : memref<1x64xf32, #tpu.memory_space<vmem>>, vector<1x64xf32>
    %12 = vector.broadcast %11 : vector<1x64xf32> to vector<8x64xf32>
    %13 = arith.addf %10, %12 : vector<8x64xf32>
    %cst_11 = arith.constant 0.000000e+00 : f32
    %14 = vector.broadcast %cst_11 : f32 to vector<8x64xf32>
    %15 = arith.maximumf %13, %14 : vector<8x64xf32>
    %16 = arith.truncf %15 : vector<8x64xf32> to vector<8x64xbf16>
    %c0_12 = arith.constant 0 : index
    %c0_13 = arith.constant 0 : index
    %17 = vector.load %arg7[%c0_12, %c0_13] : memref<64x8xbf16, #tpu.memory_space<vmem>>, vector<64x8xbf16>
    %cst_14 = arith.constant dense<0.000000e+00> : vector<8x8xf32>
    %18 = tpu.matmul %16, %17, %cst_14 {dimension_numbers = #tpu.dot_dimension_numbers<[1], [0], [0], [1], [0, 0, 1, 1], [], []>} : vector<8x64xbf16>, vector<64x8xbf16>, vector<8x8xf32> -> vector<8x8xf32>
    %c0_15 = arith.constant 0 : index
    %c0_16 = arith.constant 0 : index
    %19 = vector.load %arg8[%c0_15, %c0_16] : memref<1x8xf32, #tpu.memory_space<vmem>>, vector<1x8xf32>
    %20 = vector.broadcast %19 : vector<1x8xf32> to vector<8x8xf32>
    %21 = arith.addf %18, %20 : vector<8x8xf32>
    %c0_17 = arith.constant 0 : index
    %c0_18 = arith.constant 0 : index
    %22 = vector.load %arg1[%c0_17, %c0_18] : memref<8x768xbf16, #tpu.memory_space<vmem>>, vector<8x768xbf16>
    %c0_19 = arith.constant 0 : index
    %c0_20 = arith.constant 0 : index
    %23 = vector.load %arg3[%c0_19, %c0_20] : memref<768x64xbf16, #tpu.memory_space<vmem>>, vector<768x64xbf16>
    %cst_21 = arith.constant dense<0.000000e+00> : vector<8x64xf32>
    %24 = tpu.matmul %22, %23, %cst_21 {dimension_numbers = #tpu.dot_dimension_numbers<[1], [0], [0], [1], [0, 0, 1, 1], [], []>} : vector<8x768xbf16>, vector<768x64xbf16>, vector<8x64xf32> -> vector<8x64xf32>
    %c0_22 = arith.constant 0 : index
    %c0_23 = arith.constant 0 : index
    %25 = vector.load %arg4[%c0_22, %c0_23] : memref<1x64xf32, #tpu.memory_space<vmem>>, vector<1x64xf32>
    %26 = vector.broadcast %25 : vector<1x64xf32> to vector<8x64xf32>
    %27 = arith.addf %24, %26 : vector<8x64xf32>
    %cst_24 = arith.constant 0.000000e+00 : f32
    %28 = vector.broadcast %cst_24 : f32 to vector<8x64xf32>
    %29 = arith.maximumf %27, %28 : vector<8x64xf32>
    %30 = arith.truncf %29 : vector<8x64xf32> to vector<8x64xbf16>
    %c0_25 = arith.constant 0 : index
    %c0_26 = arith.constant 0 : index
    %31 = vector.load %arg5[%c0_25, %c0_26] : memref<64x64xbf16, #tpu.memory_space<vmem>>, vector<64x64xbf16>
    %cst_27 = arith.constant dense<0.000000e+00> : vector<8x64xf32>
    %32 = tpu.matmul %30, %31, %cst_27 {dimension_numbers = #tpu.dot_dimension_numbers<[1], [0], [0], [1], [0, 0, 1, 1], [], []>} : vector<8x64xbf16>, vector<64x64xbf16>, vector<8x64xf32> -> vector<8x64xf32>
    %c0_28 = arith.constant 0 : index
    %c0_29 = arith.constant 0 : index
    %33 = vector.load %arg6[%c0_28, %c0_29] : memref<1x64xf32, #tpu.memory_space<vmem>>, vector<1x64xf32>
    %34 = vector.broadcast %33 : vector<1x64xf32> to vector<8x64xf32>
    %35 = arith.addf %32, %34 : vector<8x64xf32>
    %cst_30 = arith.constant 0.000000e+00 : f32
    %36 = vector.broadcast %cst_30 : f32 to vector<8x64xf32>
    %37 = arith.maximumf %35, %36 : vector<8x64xf32>
    %38 = arith.truncf %37 : vector<8x64xf32> to vector<8x64xbf16>
    %c0_31 = arith.constant 0 : index
    %c0_32 = arith.constant 0 : index
    %39 = vector.load %arg7[%c0_31, %c0_32] : memref<64x8xbf16, #tpu.memory_space<vmem>>, vector<64x8xbf16>
    %cst_33 = arith.constant dense<0.000000e+00> : vector<8x8xf32>
    %40 = tpu.matmul %38, %39, %cst_33 {dimension_numbers = #tpu.dot_dimension_numbers<[1], [0], [0], [1], [0, 0, 1, 1], [], []>} : vector<8x64xbf16>, vector<64x8xbf16>, vector<8x8xf32> -> vector<8x8xf32>
    %c0_34 = arith.constant 0 : index
    %c0_35 = arith.constant 0 : index
    %41 = vector.load %arg8[%c0_34, %c0_35] : memref<1x8xf32, #tpu.memory_space<vmem>>, vector<1x8xf32>
    %42 = vector.broadcast %41 : vector<1x8xf32> to vector<8x8xf32>
    %43 = arith.addf %40, %42 : vector<8x8xf32>
    %44 = tpu.iota {dimensions = array<i32: 1>} : vector<8x8xi32>
    %c0_36 = arith.constant 0 : index
    %c0_37 = arith.constant 0 : index
    %45 = vector.load %arg2[%c0_36, %c0_37] : memref<8x1xi32, #tpu.memory_space<vmem>>, vector<8x1xi32>
    %46 = vector.broadcast %45 : vector<8x1xi32> to vector<8x8xi32>
    %47 = arith.cmpi eq, %44, %46 : vector<8x8xi32>
    %48 = arith.extui %47 : vector<8x8xi1> to vector<8x8xi32>
    %49 = arith.sitofp %48 : vector<8x8xi32> to vector<8x8xf32>
    %cst_38 = arith.constant dense<0xFF800000> : vector<8xf32>
    %50 = vector.multi_reduction <maximumf>, %21, %cst_38 [1] : vector<8x8xf32> to vector<8xf32>
    %51 = vector.shape_cast %50 : vector<8xf32> to vector<8x1xf32>
    %52 = vector.broadcast %51 : vector<8x1xf32> to vector<8x8xf32>
    %53 = arith.subf %21, %52 : vector<8x8xf32>
    %54 = math.exp %53 : vector<8x8xf32>
    %cst_39 = arith.constant dense<0.000000e+00> : vector<8xf32>
    %55 = vector.multi_reduction <add>, %54, %cst_39 [1] : vector<8x8xf32> to vector<8xf32>
    %56 = vector.shape_cast %55 : vector<8xf32> to vector<8x1xf32>
    %57 = math.log %56 : vector<8x1xf32>
    %58 = arith.addf %51, %57 : vector<8x1xf32>
    %59 = arith.mulf %49, %21 : vector<8x8xf32>
    %cst_40 = arith.constant dense<0.000000e+00> : vector<8xf32>
    %60 = vector.multi_reduction <add>, %59, %cst_40 [1] : vector<8x8xf32> to vector<8xf32>
    %61 = vector.shape_cast %60 : vector<8xf32> to vector<8x1xf32>
    %62 = arith.subf %58, %61 : vector<8x1xf32>
    %cst_41 = arith.constant dense<0.000000e+00> : vector<1xf32>
    %63 = vector.multi_reduction <add>, %62, %cst_41 [0] : vector<8x1xf32> to vector<1xf32>
    %64 = vector.shape_cast %63 : vector<1xf32> to vector<1x1xf32>
    %cst_42 = arith.constant 1.250000e-01 : f32
    %65 = vector.broadcast %cst_42 : f32 to vector<1x1xf32>
    %66 = arith.mulf %64, %65 : vector<1x1xf32>
    %cst_43 = arith.constant dense<0xFF800000> : vector<8xf32>
    %67 = vector.multi_reduction <maximumf>, %43, %cst_43 [1] : vector<8x8xf32> to vector<8xf32>
    %68 = vector.shape_cast %67 : vector<8xf32> to vector<8x1xf32>
    %69 = vector.broadcast %68 : vector<8x1xf32> to vector<8x8xf32>
    %70 = arith.subf %43, %69 : vector<8x8xf32>
    %71 = math.exp %70 : vector<8x8xf32>
    %cst_44 = arith.constant dense<0.000000e+00> : vector<8xf32>
    %72 = vector.multi_reduction <add>, %71, %cst_44 [1] : vector<8x8xf32> to vector<8xf32>
    %73 = vector.shape_cast %72 : vector<8xf32> to vector<8x1xf32>
    %74 = tpu.reciprocal %73 {approx = true} : vector<8x1xf32> -> vector<8x1xf32>
    %75 = vector.broadcast %74 : vector<8x1xf32> to vector<8x8xf32>
    %76 = arith.mulf %71, %75 : vector<8x8xf32>
    %cst_45 = arith.constant dense<0.000000e+00> : vector<8xf32>
    %77 = vector.multi_reduction <add>, %49, %cst_45 [0] : vector<8x8xf32> to vector<8xf32>
    %78 = vector.shape_cast %77 : vector<8xf32> to vector<1x8xf32>
    %cst_46 = arith.constant 0.000000e+00 : f32
    %79 = vector.broadcast %cst_46 : f32 to vector<1x8xf32>
    %80 = arith.cmpf ogt, %78, %79 : vector<1x8xf32>
    %cst_47 = arith.constant 1.000000e+02 : f32
    %81 = vector.broadcast %cst_47 : f32 to vector<1x8xf32>
    %82 = arith.select %80, %78, %81 : vector<1x8xi1>, vector<1x8xf32>
    %83 = vector.broadcast %82 : vector<1x8xf32> to vector<8x8xf32>
    %84 = arith.divf %49, %83 : vector<8x8xf32>
    %cst_48 = arith.constant dense<0.000000e+00> : vector<8xf32>
    %85 = vector.multi_reduction <add>, %76, %cst_48 [0] : vector<8x8xf32> to vector<8xf32>
    %86 = vector.shape_cast %85 : vector<8xf32> to vector<1x8xf32>
    %cst_49 = arith.constant 0.000000e+00 : f32
    %87 = vector.broadcast %cst_49 : f32 to vector<1x8xf32>
    %88 = arith.cmpf oeq, %86, %87 : vector<1x8xf32>
    %cst_50 = arith.constant 1.000000e+02 : f32
    %89 = vector.broadcast %cst_50 : f32 to vector<1x8xf32>
    %90 = arith.select %88, %89, %86 : vector<1x8xi1>, vector<1x8xf32>
    %91 = vector.broadcast %90 : vector<1x8xf32> to vector<8x8xf32>
    %92 = arith.divf %76, %91 : vector<8x8xf32>
    %cst_51 = arith.constant dense<0xFF800000> : vector<8xf32>
    %93 = vector.multi_reduction <maximumf>, %76, %cst_51 [1] : vector<8x8xf32> to vector<8xf32>
    %94 = vector.shape_cast %93 : vector<8xf32> to vector<8x1xf32>
    %95 = vector.broadcast %94 : vector<8x1xf32> to vector<8x8xf32>
    %96 = arith.cmpf oeq, %76, %95 : vector<8x8xf32>
    %c8_i32 = arith.constant 8 : i32
    %97 = vector.broadcast %c8_i32 : i32 to vector<8x8xi32>
    %98 = arith.select %96, %44, %97 : vector<8x8xi1>, vector<8x8xi32>
    %cst_52 = arith.constant dense<2147483647> : vector<8xi32>
    %99 = vector.multi_reduction <minsi>, %98, %cst_52 [1] : vector<8x8xi32> to vector<8xi32>
    %100 = vector.shape_cast %99 : vector<8xi32> to vector<8x1xi32>
    %101 = vector.broadcast %100 : vector<8x1xi32> to vector<8x8xi32>
    %102 = arith.cmpi eq, %44, %101 : vector<8x8xi32>
    %103 = arith.extui %102 : vector<8x8xi1> to vector<8x8xi32>
    %104 = arith.sitofp %103 : vector<8x8xi32> to vector<8x8xf32>
    %cst_53 = arith.constant dense<0.000000e+00> : vector<8xf32>
    %105 = vector.multi_reduction <add>, %104, %cst_53 [0] : vector<8x8xf32> to vector<8xf32>
    %106 = vector.shape_cast %105 : vector<8xf32> to vector<1x8xf32>
    %cst_54 = arith.constant 0.000000e+00 : f32
    %107 = vector.broadcast %cst_54 : f32 to vector<1x8xf32>
    %108 = arith.cmpf ogt, %106, %107 : vector<1x8xf32>
    %109 = arith.andi %80, %108 : vector<1x8xi1>
    %110 = arith.extui %109 : vector<1x8xi1> to vector<1x8xi32>
    %111 = arith.sitofp %110 : vector<1x8xi32> to vector<1x8xf32>
    %cst_55 = arith.constant dense<0.000000e+00> : vector<1xf32>
    %112 = vector.multi_reduction <add>, %111, %cst_55 [1] : vector<1x8xf32> to vector<1xf32>
    %113 = vector.shape_cast %112 : vector<1xf32> to vector<1x1xf32>
    %cst_56 = arith.constant 0.000000e+00 : f32
    %114 = vector.broadcast %cst_56 : f32 to vector<1x1xf32>
    %115 = arith.cmpf ogt, %113, %114 : vector<1x1xf32>
    %cst_57 = arith.constant 1.000000e+00 : f32
    %116 = vector.broadcast %cst_57 : f32 to vector<1x1xf32>
    %117 = arith.maximumf %113, %116 : vector<1x1xf32>
    %cst_58 = arith.constant 1.000000e+00 : f32
    %118 = vector.broadcast %cst_58 : f32 to vector<1x1xf32>
    %119 = arith.divf %118, %117 : vector<1x1xf32>
    %cst_59 = arith.constant 0.000000e+00 : f32
    %120 = vector.broadcast %cst_59 : f32 to vector<1x1xf32>
    %121 = arith.select %115, %119, %120 : vector<1x1xi1>, vector<1x1xf32>
    %122 = vector.broadcast %111 : vector<1x8xf32> to vector<8x8xf32>
    %123 = arith.mulf %84, %122 : vector<8x8xf32>
    %cst_60 = arith.constant dense<0.000000e+00> : vector<8x8xf32>
    %124 = tpu.matmul %123, %84, %cst_60 {dimension_numbers = #tpu.dot_dimension_numbers<[1], [1], [0], [0], [0, 0, 1, 0], [], []>} : vector<8x8xf32>, vector<8x8xf32>, vector<8x8xf32> -> vector<8x8xf32>
    %125 = vector.broadcast %121 : vector<1x1xf32> to vector<8x8xf32>
    %126 = arith.mulf %124, %125 : vector<8x8xf32>
    %127 = vector.broadcast %111 : vector<1x8xf32> to vector<8x8xf32>
    %128 = arith.mulf %92, %127 : vector<8x8xf32>
    %cst_61 = arith.constant dense<0.000000e+00> : vector<8x8xf32>
    %129 = tpu.matmul %128, %92, %cst_61 {dimension_numbers = #tpu.dot_dimension_numbers<[1], [1], [0], [0], [0, 0, 1, 0], [], []>} : vector<8x8xf32>, vector<8x8xf32>, vector<8x8xf32> -> vector<8x8xf32>
    %130 = vector.broadcast %121 : vector<1x1xf32> to vector<8x8xf32>
    %131 = arith.mulf %129, %130 : vector<8x8xf32>
    %cst_62 = arith.constant dense<0.000000e+00> : vector<8x8xf32>
    %132 = tpu.matmul %123, %92, %cst_62 {dimension_numbers = #tpu.dot_dimension_numbers<[1], [1], [0], [0], [0, 0, 1, 0], [], []>} : vector<8x8xf32>, vector<8x8xf32>, vector<8x8xf32> -> vector<8x8xf32>
    %133 = vector.broadcast %121 : vector<1x1xf32> to vector<8x8xf32>
    %134 = arith.mulf %132, %133 : vector<8x8xf32>
    %135 = arith.mulf %15, %15 : vector<8x64xf32>
    %cst_63 = arith.constant dense<0.000000e+00> : vector<8xf32>
    %136 = vector.multi_reduction <add>, %135, %cst_63 [1] : vector<8x64xf32> to vector<8xf32>
    %137 = vector.shape_cast %136 : vector<8xf32> to vector<8x1xf32>
    %138 = arith.mulf %37, %37 : vector<8x64xf32>
    %cst_64 = arith.constant dense<0.000000e+00> : vector<8xf32>
    %139 = vector.multi_reduction <add>, %138, %cst_64 [1] : vector<8x64xf32> to vector<8xf32>
    %140 = vector.shape_cast %139 : vector<8xf32> to vector<8x1xf32>
    %141 = tpu.transpose %137, [1, 0] : vector<8x1xf32> -> vector<1x8xf32>
    %142 = vector.broadcast %137 : vector<8x1xf32> to vector<8x8xf32>
    %143 = vector.broadcast %141 : vector<1x8xf32> to vector<8x8xf32>
    %144 = arith.addf %142, %143 : vector<8x8xf32>
    %cst_65 = arith.constant dense<0.000000e+00> : vector<8x8xf32>
    %145 = tpu.matmul %15, %15, %cst_65 {dimension_numbers = #tpu.dot_dimension_numbers<[1], [1], [0], [0], [0, 0, 1, 0], [], []>} : vector<8x64xf32>, vector<8x64xf32>, vector<8x8xf32> -> vector<8x8xf32>
    %cst_66 = arith.constant 2.000000e+00 : f32
    %146 = vector.broadcast %cst_66 : f32 to vector<8x8xf32>
    %147 = arith.mulf %146, %145 : vector<8x8xf32>
    %148 = arith.subf %144, %147 : vector<8x8xf32>
    %cst_67 = arith.constant 0.000000e+00 : f32
    %149 = vector.broadcast %cst_67 : f32 to vector<8x8xf32>
    %150 = arith.maximumf %148, %149 : vector<8x8xf32>
    %151 = tpu.transpose %140, [1, 0] : vector<8x1xf32> -> vector<1x8xf32>
    %152 = vector.broadcast %140 : vector<8x1xf32> to vector<8x8xf32>
    %153 = vector.broadcast %151 : vector<1x8xf32> to vector<8x8xf32>
    %154 = arith.addf %152, %153 : vector<8x8xf32>
    %cst_68 = arith.constant dense<0.000000e+00> : vector<8x8xf32>
    %155 = tpu.matmul %37, %37, %cst_68 {dimension_numbers = #tpu.dot_dimension_numbers<[1], [1], [0], [0], [0, 0, 1, 0], [], []>} : vector<8x64xf32>, vector<8x64xf32>, vector<8x8xf32> -> vector<8x8xf32>
    %cst_69 = arith.constant 2.000000e+00 : f32
    %156 = vector.broadcast %cst_69 : f32 to vector<8x8xf32>
    %157 = arith.mulf %156, %155 : vector<8x8xf32>
    %158 = arith.subf %154, %157 : vector<8x8xf32>
    %cst_70 = arith.constant 0.000000e+00 : f32
    %159 = vector.broadcast %cst_70 : f32 to vector<8x8xf32>
    %160 = arith.maximumf %158, %159 : vector<8x8xf32>
    %161 = tpu.transpose %140, [1, 0] : vector<8x1xf32> -> vector<1x8xf32>
    %162 = vector.broadcast %137 : vector<8x1xf32> to vector<8x8xf32>
    %163 = vector.broadcast %161 : vector<1x8xf32> to vector<8x8xf32>
    %164 = arith.addf %162, %163 : vector<8x8xf32>
    %cst_71 = arith.constant dense<0.000000e+00> : vector<8x8xf32>
    %165 = tpu.matmul %15, %37, %cst_71 {dimension_numbers = #tpu.dot_dimension_numbers<[1], [1], [0], [0], [0, 0, 1, 0], [], []>} : vector<8x64xf32>, vector<8x64xf32>, vector<8x8xf32> -> vector<8x8xf32>
    %cst_72 = arith.constant 2.000000e+00 : f32
    %166 = vector.broadcast %cst_72 : f32 to vector<8x8xf32>
    %167 = arith.mulf %166, %165 : vector<8x8xf32>
    %168 = arith.subf %164, %167 : vector<8x8xf32>
    %cst_73 = arith.constant 0.000000e+00 : f32
    %169 = vector.broadcast %cst_73 : f32 to vector<8x8xf32>
    %170 = arith.maximumf %168, %169 : vector<8x8xf32>
    %cst_74 = arith.constant dense<0.000000e+00> : vector<8xf32>
    %171 = vector.multi_reduction <add>, %150, %cst_74 [1] : vector<8x8xf32> to vector<8xf32>
    %172 = vector.shape_cast %171 : vector<8xf32> to vector<8x1xf32>
    %cst_75 = arith.constant dense<0.000000e+00> : vector<1xf32>
    %173 = vector.multi_reduction <add>, %172, %cst_75 [0] : vector<8x1xf32> to vector<1xf32>
    %174 = vector.shape_cast %173 : vector<1xf32> to vector<1x1xf32>
    %cst_76 = arith.constant dense<0.000000e+00> : vector<8xf32>
    %175 = vector.multi_reduction <add>, %160, %cst_76 [1] : vector<8x8xf32> to vector<8xf32>
    %176 = vector.shape_cast %175 : vector<8xf32> to vector<8x1xf32>
    %cst_77 = arith.constant dense<0.000000e+00> : vector<1xf32>
    %177 = vector.multi_reduction <add>, %176, %cst_77 [0] : vector<8x1xf32> to vector<1xf32>
    %178 = vector.shape_cast %177 : vector<1xf32> to vector<1x1xf32>
    %179 = arith.addf %174, %178 : vector<1x1xf32>
    %cst_78 = arith.constant dense<0.000000e+00> : vector<8xf32>
    %180 = vector.multi_reduction <add>, %170, %cst_78 [1] : vector<8x8xf32> to vector<8xf32>
    %181 = vector.shape_cast %180 : vector<8xf32> to vector<8x1xf32>
    %cst_79 = arith.constant dense<0.000000e+00> : vector<1xf32>
    %182 = vector.multi_reduction <add>, %181, %cst_79 [0] : vector<8x1xf32> to vector<1xf32>
    %183 = vector.shape_cast %182 : vector<1xf32> to vector<1x1xf32>
    %cst_80 = arith.constant 2.000000e+00 : f32
    %184 = vector.broadcast %cst_80 : f32 to vector<1x1xf32>
    %185 = arith.mulf %184, %183 : vector<1x1xf32>
    %186 = arith.addf %179, %185 : vector<1x1xf32>
    %cst_81 = arith.constant 0.00416666688 : f32
    %187 = vector.broadcast %cst_81 : f32 to vector<1x1xf32>
    %188 = arith.mulf %186, %187 : vector<1x1xf32>
    %cst_82 = arith.constant 2.500000e-01 : f32
    %189 = vector.broadcast %cst_82 : f32 to vector<1x1xf32>
    %190 = arith.mulf %188, %189 : vector<1x1xf32>
    %cst_83 = arith.constant 1.000000e+00 : f32
    %191 = vector.broadcast %cst_83 : f32 to vector<1x1xf32>
    %192 = arith.divf %191, %190 : vector<1x1xf32>
    %193 = tpu.iota {dimensions = array<i32: 0>} : vector<8x40xi32>
    %194 = tpu.iota {dimensions = array<i32: 1>} : vector<8x40xi32>
    %cst_84 = arith.constant 0.000000e+00 : f32
    %195 = vector.broadcast %cst_84 : f32 to vector<8x40xf32>
    %cst_85 = arith.constant 0.000000e+00 : f32
    %196 = vector.broadcast %cst_85 : f32 to vector<8x40xf32>
    %c0_i32 = arith.constant 0 : i32
    %197 = vector.broadcast %c0_i32 : i32 to vector<8x40xi32>
    %198 = arith.addi %193, %197 : vector<8x40xi32>
    %199 = arith.cmpi eq, %194, %198 : vector<8x40xi32>
    %200 = arith.extui %199 : vector<8x40xi1> to vector<8x40xi32>
    %201 = arith.sitofp %200 : vector<8x40xi32> to vector<8x40xf32>
    %202 = arith.addf %195, %201 : vector<8x40xf32>
    %cst_86 = arith.constant 1.000000e+00 : f32
    %203 = vector.broadcast %cst_86 : f32 to vector<8x40xf32>
    %204 = arith.mulf %201, %203 : vector<8x40xf32>
    %205 = arith.addf %196, %204 : vector<8x40xf32>
    %c8_i32_87 = arith.constant 8 : i32
    %206 = vector.broadcast %c8_i32_87 : i32 to vector<8x40xi32>
    %207 = arith.addi %193, %206 : vector<8x40xi32>
    %208 = arith.cmpi eq, %194, %207 : vector<8x40xi32>
    %209 = arith.extui %208 : vector<8x40xi1> to vector<8x40xi32>
    %210 = arith.sitofp %209 : vector<8x40xi32> to vector<8x40xf32>
    %211 = arith.addf %202, %210 : vector<8x40xf32>
    %cst_88 = arith.constant 5.000000e-01 : f32
    %212 = vector.broadcast %cst_88 : f32 to vector<8x40xf32>
    %213 = arith.mulf %210, %212 : vector<8x40xf32>
    %214 = arith.addf %205, %213 : vector<8x40xf32>
    %c16_i32 = arith.constant 16 : i32
    %215 = vector.broadcast %c16_i32 : i32 to vector<8x40xi32>
    %216 = arith.addi %193, %215 : vector<8x40xi32>
    %217 = arith.cmpi eq, %194, %216 : vector<8x40xi32>
    %218 = arith.extui %217 : vector<8x40xi1> to vector<8x40xi32>
    %219 = arith.sitofp %218 : vector<8x40xi32> to vector<8x40xf32>
    %220 = arith.addf %211, %219 : vector<8x40xf32>
    %cst_89 = arith.constant 2.500000e-01 : f32
    %221 = vector.broadcast %cst_89 : f32 to vector<8x40xf32>
    %222 = arith.mulf %219, %221 : vector<8x40xf32>
    %223 = arith.addf %214, %222 : vector<8x40xf32>
    %c24_i32 = arith.constant 24 : i32
    %224 = vector.broadcast %c24_i32 : i32 to vector<8x40xi32>
    %225 = arith.addi %193, %224 : vector<8x40xi32>
    %226 = arith.cmpi eq, %194, %225 : vector<8x40xi32>
    %227 = arith.extui %226 : vector<8x40xi1> to vector<8x40xi32>
    %228 = arith.sitofp %227 : vector<8x40xi32> to vector<8x40xf32>
    %229 = arith.addf %220, %228 : vector<8x40xf32>
    %cst_90 = arith.constant 1.250000e-01 : f32
    %230 = vector.broadcast %cst_90 : f32 to vector<8x40xf32>
    %231 = arith.mulf %228, %230 : vector<8x40xf32>
    %232 = arith.addf %223, %231 : vector<8x40xf32>
    %c32_i32 = arith.constant 32 : i32
    %233 = vector.broadcast %c32_i32 : i32 to vector<8x40xi32>
    %234 = arith.addi %193, %233 : vector<8x40xi32>
    %235 = arith.cmpi eq, %194, %234 : vector<8x40xi32>
    %236 = arith.extui %235 : vector<8x40xi1> to vector<8x40xi32>
    %237 = arith.sitofp %236 : vector<8x40xi32> to vector<8x40xf32>
    %238 = arith.addf %229, %237 : vector<8x40xf32>
    %cst_91 = arith.constant 6.250000e-02 : f32
    %239 = vector.broadcast %cst_91 : f32 to vector<8x40xf32>
    %240 = arith.mulf %237, %239 : vector<8x40xf32>
    %241 = arith.addf %232, %240 : vector<8x40xf32>
    %cst_92 = arith.constant dense<0.000000e+00> : vector<8x40xf32>
    %242 = tpu.matmul %150, %241, %cst_92 {dimension_numbers = #tpu.dot_dimension_numbers<[1], [0], [0], [1], [0, 0, 1, 1], [], []>} : vector<8x8xf32>, vector<8x40xf32>, vector<8x40xf32> -> vector<8x40xf32>
    %cst_93 = arith.constant 0.000000e+00 : f32
    %243 = vector.broadcast %cst_93 : f32 to vector<8x40xf32>
    %244 = arith.subf %243, %242 : vector<8x40xf32>
    %245 = vector.broadcast %192 : vector<1x1xf32> to vector<8x40xf32>
    %246 = arith.mulf %244, %245 : vector<8x40xf32>
    %247 = math.exp %246 : vector<8x40xf32>
    %cst_94 = arith.constant dense<0.000000e+00> : vector<8x40xf32>
    %248 = tpu.matmul %126, %238, %cst_94 {dimension_numbers = #tpu.dot_dimension_numbers<[1], [0], [0], [1], [0, 0, 1, 1], [], []>} : vector<8x8xf32>, vector<8x40xf32>, vector<8x40xf32> -> vector<8x40xf32>
    %249 = arith.mulf %248, %247 : vector<8x40xf32>
    %cst_95 = arith.constant dense<0.000000e+00> : vector<8xf32>
    %250 = vector.multi_reduction <add>, %249, %cst_95 [1] : vector<8x40xf32> to vector<8xf32>
    %251 = vector.shape_cast %250 : vector<8xf32> to vector<8x1xf32>
    %cst_96 = arith.constant dense<0.000000e+00> : vector<1xf32>
    %252 = vector.multi_reduction <add>, %251, %cst_96 [0] : vector<8x1xf32> to vector<1xf32>
    %253 = vector.shape_cast %252 : vector<1xf32> to vector<1x1xf32>
    %cst_97 = arith.constant dense<0.000000e+00> : vector<8x40xf32>
    %254 = tpu.matmul %160, %241, %cst_97 {dimension_numbers = #tpu.dot_dimension_numbers<[1], [0], [0], [1], [0, 0, 1, 1], [], []>} : vector<8x8xf32>, vector<8x40xf32>, vector<8x40xf32> -> vector<8x40xf32>
    %cst_98 = arith.constant 0.000000e+00 : f32
    %255 = vector.broadcast %cst_98 : f32 to vector<8x40xf32>
    %256 = arith.subf %255, %254 : vector<8x40xf32>
    %257 = vector.broadcast %192 : vector<1x1xf32> to vector<8x40xf32>
    %258 = arith.mulf %256, %257 : vector<8x40xf32>
    %259 = math.exp %258 : vector<8x40xf32>
    %cst_99 = arith.constant dense<0.000000e+00> : vector<8x40xf32>
    %260 = tpu.matmul %131, %238, %cst_99 {dimension_numbers = #tpu.dot_dimension_numbers<[1], [0], [0], [1], [0, 0, 1, 1], [], []>} : vector<8x8xf32>, vector<8x40xf32>, vector<8x40xf32> -> vector<8x40xf32>
    %261 = arith.mulf %260, %259 : vector<8x40xf32>
    %cst_100 = arith.constant dense<0.000000e+00> : vector<8xf32>
    %262 = vector.multi_reduction <add>, %261, %cst_100 [1] : vector<8x40xf32> to vector<8xf32>
    %263 = vector.shape_cast %262 : vector<8xf32> to vector<8x1xf32>
    %cst_101 = arith.constant dense<0.000000e+00> : vector<1xf32>
    %264 = vector.multi_reduction <add>, %263, %cst_101 [0] : vector<8x1xf32> to vector<1xf32>
    %265 = vector.shape_cast %264 : vector<1xf32> to vector<1x1xf32>
    %cst_102 = arith.constant dense<0.000000e+00> : vector<8x40xf32>
    %266 = tpu.matmul %170, %241, %cst_102 {dimension_numbers = #tpu.dot_dimension_numbers<[1], [0], [0], [1], [0, 0, 1, 1], [], []>} : vector<8x8xf32>, vector<8x40xf32>, vector<8x40xf32> -> vector<8x40xf32>
    %cst_103 = arith.constant 0.000000e+00 : f32
    %267 = vector.broadcast %cst_103 : f32 to vector<8x40xf32>
    %268 = arith.subf %267, %266 : vector<8x40xf32>
    %269 = vector.broadcast %192 : vector<1x1xf32> to vector<8x40xf32>
    %270 = arith.mulf %268, %269 : vector<8x40xf32>
    %271 = math.exp %270 : vector<8x40xf32>
    %cst_104 = arith.constant dense<0.000000e+00> : vector<8x40xf32>
    %272 = tpu.matmul %134, %238, %cst_104 {dimension_numbers = #tpu.dot_dimension_numbers<[1], [0], [0], [1], [0, 0, 1, 1], [], []>} : vector<8x8xf32>, vector<8x40xf32>, vector<8x40xf32> -> vector<8x40xf32>
    %273 = arith.mulf %272, %271 : vector<8x40xf32>
    %cst_105 = arith.constant dense<0.000000e+00> : vector<8xf32>
    %274 = vector.multi_reduction <add>, %273, %cst_105 [1] : vector<8x40xf32> to vector<8xf32>
    %275 = vector.shape_cast %274 : vector<8xf32> to vector<8x1xf32>
    %cst_106 = arith.constant dense<0.000000e+00> : vector<1xf32>
    %276 = vector.multi_reduction <add>, %275, %cst_106 [0] : vector<8x1xf32> to vector<1xf32>
    %277 = vector.shape_cast %276 : vector<1xf32> to vector<1x1xf32>
    %278 = arith.cmpf one, %247, %247 : vector<8x40xf32>
    %cst_107 = arith.constant 1.000000e+00 : f32
    %cst_108 = arith.constant 0.000000e+00 : f32
    %279 = vector.broadcast %cst_107 : f32 to vector<8x40xf32>
    %280 = vector.broadcast %cst_108 : f32 to vector<8x40xf32>
    %281 = arith.select %278, %279, %280 : vector<8x40xi1>, vector<8x40xf32>
    %282 = arith.cmpf one, %259, %259 : vector<8x40xf32>
    %cst_109 = arith.constant 1.000000e+00 : f32
    %cst_110 = arith.constant 0.000000e+00 : f32
    %283 = vector.broadcast %cst_109 : f32 to vector<8x40xf32>
    %284 = vector.broadcast %cst_110 : f32 to vector<8x40xf32>
    %285 = arith.select %282, %283, %284 : vector<8x40xi1>, vector<8x40xf32>
    %286 = arith.cmpf one, %271, %271 : vector<8x40xf32>
    %cst_111 = arith.constant 1.000000e+00 : f32
    %cst_112 = arith.constant 0.000000e+00 : f32
    %287 = vector.broadcast %cst_111 : f32 to vector<8x40xf32>
    %288 = vector.broadcast %cst_112 : f32 to vector<8x40xf32>
    %289 = arith.select %286, %287, %288 : vector<8x40xi1>, vector<8x40xf32>
    %290 = arith.maximumf %285, %289 : vector<8x40xf32>
    %291 = arith.maximumf %281, %290 : vector<8x40xf32>
    %cst_113 = arith.constant dense<0xFF800000> : vector<8xf32>
    %292 = vector.multi_reduction <maximumf>, %291, %cst_113 [1] : vector<8x40xf32> to vector<8xf32>
    %293 = vector.shape_cast %292 : vector<8xf32> to vector<8x1xf32>
    %cst_114 = arith.constant dense<0xFF800000> : vector<1xf32>
    %294 = vector.multi_reduction <maximumf>, %293, %cst_114 [0] : vector<8x1xf32> to vector<1xf32>
    %295 = vector.shape_cast %294 : vector<1xf32> to vector<1x1xf32>
    %cst_115 = arith.constant 0.000000e+00 : f32
    %296 = vector.broadcast %cst_115 : f32 to vector<1x1xf32>
    %297 = arith.cmpf ogt, %295, %296 : vector<1x1xf32>
    %298 = arith.addf %253, %265 : vector<1x1xf32>
    %cst_116 = arith.constant 2.000000e+00 : f32
    %299 = vector.broadcast %cst_116 : f32 to vector<1x1xf32>
    %300 = arith.mulf %299, %277 : vector<1x1xf32>
    %301 = arith.subf %298, %300 : vector<1x1xf32>
    %cst_117 = arith.constant 0.000000e+00 : f32
    %302 = vector.broadcast %cst_117 : f32 to vector<1x1xf32>
    %303 = arith.select %297, %302, %301 : vector<1x1xi1>, vector<1x1xf32>
    %304 = tpu.iota {dimensions = array<i32: 1>} : vector<1x2xi32>
    %c0_i32_118 = arith.constant 0 : i32
    %305 = vector.broadcast %c0_i32_118 : i32 to vector<1x2xi32>
    %306 = arith.cmpi eq, %304, %305 : vector<1x2xi32>
    %307 = vector.shape_cast %66 : vector<1x1xf32> to vector<1x1xf32>
    %308 = vector.broadcast %307 : vector<1x1xf32> to vector<1x2xf32>
    %309 = vector.shape_cast %303 : vector<1x1xf32> to vector<1x1xf32>
    %310 = vector.broadcast %309 : vector<1x1xf32> to vector<1x2xf32>
    %311 = arith.select %306, %308, %310 : vector<1x2xi1>, vector<1x2xf32>
    %c0_119 = arith.constant 0 : index
    %c0_120 = arith.constant 0 : index
    %312 = vector.load %arg9[%c0_119, %c0_120] : memref<1x2xf32, #tpu.memory_space<vmem>>, vector<1x2xf32>
    tpu.vector_store %arg9[%c0_119, %c0_120], %311 {strides = array<i32>} : memref<1x2xf32, #tpu.memory_space<vmem>>, vector<1x2xf32>,
    return
  }
}

</mosaic_0001>

<llo_original>
// kernel: _deepda_forward.1
$region0: #{_deepda_forward.1}
  #allocation0 [shape = 'u32[]', space=smem, size = 0x4, offset = 0x4, fixed_abs, tag = 'smem constant byte address 0x4 - core index']
  #allocation1 [shape = 'u32[72,128]{1,0:T(1,128)}', space=vmem, size = 0x9000, scoped, tag = 'internal scratch']
  %s0 = inlined_call_operand.vmem [shape: bf16[8,768], index: 0, kind: input, shape index: {}]
  %s1 = inlined_call_operand.vmem [shape: bf16[8,768], index: 1, kind: input, shape index: {}]
  %s2 = inlined_call_operand.vmem [shape: s32[8,1], index: 2, kind: input, shape index: {}]
  %s3 = inlined_call_operand.vmem [shape: bf16[768,64], index: 3, kind: input, shape index: {}]
  %s4 = inlined_call_operand.vmem [shape: f32[1,64], index: 4, kind: input, shape index: {}]
  %s5 = inlined_call_operand.vmem [shape: bf16[64,64], index: 5, kind: input, shape index: {}]
  %s6 = inlined_call_operand.vmem [shape: f32[1,64], index: 6, kind: input, shape index: {}]
  %s7 = inlined_call_operand.vmem [shape: bf16[64,8], index: 7, kind: input, shape index: {}]
  %s8 = inlined_call_operand.vmem [shape: f32[1,8], index: 8, kind: input, shape index: {}]
  %s9 = inlined_call_operand.vmem [shape: f32[1,2], index: 9, kind: output, shape index: {}]
  %s10 = sld [smem:[#allocation0]]
  $region46: #{_deepda_forward.1} parent=0
    _
  %s12 = ssub.s32 1, %s10
  %s13 = scalar_select 0, %s12, %s10
  // Predicated region
  $region2: #{_deepda_forward.1} parent=0 // pred_check
    _
  $region3: #{_deepda_forward.1} parent=0 // pred_check_branch
    %15 = sbr.rel (0) target = $region5
  $region4: #{_deepda_forward.1} parent=0 // pred_region
    _
  $region5: #{_deepda_forward.1} parent=0 // pred_fallthru
    _
  // Predicated region
  $region6: #{_deepda_forward.1} parent=0 // pred_check
    _
  $region7: #{_deepda_forward.1} parent=0 // pred_check_branch
    %17 = sbr.rel (0) target = $region9
  $region8: #{_deepda_forward.1} parent=0 // pred_region
    _
  $region9: #{_deepda_forward.1} parent=0 // pred_fallthru
    _
  // Predicated region
  $region10: #{_deepda_forward.1} parent=0 // pred_check
    _
  $region11: #{_deepda_forward.1} parent=0 // pred_check_branch
    %19 = sbr.rel (0) target = $region13
  $region12: #{_deepda_forward.1} parent=0 // pred_region
    _
  $region13: #{_deepda_forward.1} parent=0 // pred_fallthru
    _
  // Predicated region
  $region14: #{_deepda_forward.1} parent=0 // pred_check
    _
  $region15: #{_deepda_forward.1} parent=0 // pred_check_branch
    %21 = sbr.rel (0) target = $region17
  $region16: #{_deepda_forward.1} parent=0 // pred_region
    _
  $region17: #{_deepda_forward.1} parent=0 // pred_fallthru
    _
  // Predicated region
  $region18: #{_deepda_forward.1} parent=0 // pred_check
    _
  $region19: #{_deepda_forward.1} parent=0 // pred_check_branch
    %23 = sbr.rel (0) target = $region21
  $region20: #{_deepda_forward.1} parent=0 // pred_region
    _
  $region21: #{_deepda_forward.1} parent=0 // pred_fallthru
    _
  // Predicated region
  $region22: #{_deepda_forward.1} parent=0 // pred_check
    _
  $region23: #{_deepda_forward.1} parent=0 // pred_check_branch
    %25 = sbr.rel (0) target = $region25
  $region24: #{_deepda_forward.1} parent=0 // pred_region
    _
  $region25: #{_deepda_forward.1} parent=0 // pred_fallthru
    _
  // Predicated region
  $region26: #{_deepda_forward.1} parent=0 // pred_check
    _
  $region27: #{_deepda_forward.1} parent=0 // pred_check_branch
    %27 = sbr.rel (0) target = $region29
  $region28: #{_deepda_forward.1} parent=0 // pred_region
    _
  $region29: #{_deepda_forward.1} parent=0 // pred_fallthru
    _
  // Predicated region
  $region30: #{_deepda_forward.1} parent=0 // pred_check
    _
  $region31: #{_deepda_forward.1} parent=0 // pred_check_branch
    %29 = sbr.rel (0) target = $region33
  $region32: #{_deepda_forward.1} parent=0 // pred_region
    _
  $region33: #{_deepda_forward.1} parent=0 // pred_fallthru
    _
  // Predicated region
  $region34: #{_deepda_forward.1} parent=0 // pred_check
    _
  $region35: #{_deepda_forward.1} parent=0 // pred_check_branch
    %31 = sbr.rel (0) target = $region37
  $region36: #{_deepda_forward.1} parent=0 // pred_region
    _
  $region37: #{_deepda_forward.1} parent=0 // pred_fallthru
    _
  %v33 = vld [vmem:[%s0] sm:$0xff]
  %v34 = vld [vmem:[%s0 + $0x8] sm:$0xff]
  %v35 = vld [vmem:[%s0 + $0x10] sm:$0xff]
  %v36 = vld [vmem:[%s3] sm:$0xf]
  %v37 = vld [vmem:[%s3 + $0x4] sm:$0xf]
  %v38 = vld [vmem:[%s3 + $0x8] sm:$0xf]
  %v39 = vld [vmem:[%s3 + $0xc] sm:$0xf]
  %v40 = vld [vmem:[%s3 + $0x10] sm:$0xf]
  %v41 = vld [vmem:[%s3 + $0x14] sm:$0xf]
  %v42 = vld [vmem:[%s3 + $0x18] sm:$0xf]
  %v43 = vld [vmem:[%s3 + $0x1c] sm:$0xf]
  %v44 = vld [vmem:[%s3 + $0x20] sm:$0xf]
  %v45 = vld [vmem:[%s3 + $0x24] sm:$0xf]
  %v46 = vld [vmem:[%s3 + $0x28] sm:$0xf]
  %v47 = vld [vmem:[%s3 + $0x2c] sm:$0xf]
  %v48 = vld [vmem:[%s3 + $0x30] sm:$0xf]
  %v49 = vld [vmem:[%s3 + $0x34] sm:$0xf]
  %v50 = vld [vmem:[%s3 + $0x38] sm:$0xf]
  %v51 = vld [vmem:[%s3 + $0x3c] sm:$0xf]
  %v52 = vld [vmem:[%s3 + $0x40] sm:$0xf]
  %v53 = vld [vmem:[%s3 + $0x44] sm:$0xf]
  %v54 = vld [vmem:[%s3 + $0x48] sm:$0xf]
  %v55 = vld [vmem:[%s3 + $0x4c] sm:$0xf]
  %v56 = vld [vmem:[%s3 + $0x50] sm:$0xf]
  %v57 = vld [vmem:[%s3 + $0x54] sm:$0xf]
  %v58 = vld [vmem:[%s3 + $0x58] sm:$0xf]
  %v59 = vld [vmem:[%s3 + $0x5c] sm:$0xf]
  %v60 = vld [vmem:[%s3 + $0x60] sm:$0xf]
  %v61 = vld [vmem:[%s3 + $0x64] sm:$0xf]
  %v62 = vld [vmem:[%s3 + $0x68] sm:$0xf]
  %v63 = vld [vmem:[%s3 + $0x6c] sm:$0xf]
  %v64 = vld [vmem:[%s3 + $0x70] sm:$0xf]
  %v65 = vld [vmem:[%s3 + $0x74] sm:$0xf]
  %v66 = vld [vmem:[%s3 + $0x78] sm:$0xf]
  %v67 = vld [vmem:[%s3 + $0x7c] sm:$0xf]
  %v68 = vld [vmem:[%s3 + $0x80] sm:$0xf]
  %v69 = vld [vmem:[%s3 + $0x84] sm:$0xf]
  %v70 = vld [vmem:[%s3 + $0x88] sm:$0xf]
  %v71 = vld [vmem:[%s3 + $0x8c] sm:$0xf]
  %v72 = vld [vmem:[%s3 + $0x90] sm:$0xf]
  %v73 = vld [vmem:[%s3 + $0x94] sm:$0xf]
  %v74 = vld [vmem:[%s3 + $0x98] sm:$0xf]
  %v75 = vld [vmem:[%s3 + $0x9c] sm:$0xf]
  %v76 = vld [vmem:[%s3 + $0xa0] sm:$0xf]
  %v77 = vld [vmem:[%s3 + $0xa4] sm:$0xf]
  %v78 = vld [vmem:[%s3 + $0xa8] sm:$0xf]
  %v79 = vld [vmem:[%s3 + $0xac] sm:$0xf]
  %v80 = vld [vmem:[%s3 + $0xb0] sm:$0xf]
  %v81 = vld [vmem:[%s3 + $0xb4] sm:$0xf]
  %v82 = vld [vmem:[%s3 + $0xb8] sm:$0xf]
  %v83 = vld [vmem:[%s3 + $0xbc] sm:$0xf]
  %v84 = vld [vmem:[%s3 + $0xc0] sm:$0xf]
  %v85 = vld [vmem:[%s3 + $0xc4] sm:$0xf]
  %v86 = vld [vmem:[%s3 + $0xc8] sm:$0xf]
  %v87 = vld [vmem:[%s3 + $0xcc] sm:$0xf]
  %v88 = vld [vmem:[%s3 + $0xd0] sm:$0xf]
  %v89 = vld [vmem:[%s3 + $0xd4] sm:$0xf]
  %v90 = vld [vmem:[%s3 + $0xd8] sm:$0xf]
  %v91 = vld [vmem:[%s3 + $0xdc] sm:$0xf]
  %v92 = vld [vmem:[%s3 + $0xe0] sm:$0xf]
  %v93 = vld [vmem:[%s3 + $0xe4] sm:$0xf]
  %v94 = vld [vmem:[%s3 + $0xe8] sm:$0xf]
  %v95 = vld [vmem:[%s3 + $0xec] sm:$0xf]
  %v96 = vld [vmem:[%s3 + $0xf0] sm:$0xf]
  %v97 = vld [vmem:[%s3 + $0xf4] sm:$0xf]
  %v98 = vld [vmem:[%s3 + $0xf8] sm:$0xf]
  %v99 = vld [vmem:[%s3 + $0xfc] sm:$0xf]
  %v100 = vld [vmem:[%s3 + $0x100] sm:$0xf]
  %v101 = vld [vmem:[%s3 + $0x104] sm:$0xf]
  %v102 = vld [vmem:[%s3 + $0x108] sm:$0xf]
  %v103 = vld [vmem:[%s3 + $0x10c] sm:$0xf]
  %v104 = vld [vmem:[%s3 + $0x110] sm:$0xf]
  %v105 = vld [vmem:[%s3 + $0x114] sm:$0xf]
  %v106 = vld [vmem:[%s3 + $0x118] sm:$0xf]
  %v107 = vld [vmem:[%s3 + $0x11c] sm:$0xf]
  %v108 = vld [vmem:[%s3 + $0x120] sm:$0xf]
  %v109 = vld [vmem:[%s3 + $0x124] sm:$0xf]
  %v110 = vld [vmem:[%s3 + $0x128] sm:$0xf]
  %v111 = vld [vmem:[%s3 + $0x12c] sm:$0xf]
  %v112 = vld [vmem:[%s3 + $0x130] sm:$0xf]
  %v113 = vld [vmem:[%s3 + $0x134] sm:$0xf]
  %v114 = vld [vmem:[%s3 + $0x138] sm:$0xf]
  %v115 = vld [vmem:[%s3 + $0x13c] sm:$0xf]
  %v116 = vld [vmem:[%s3 + $0x140] sm:$0xf]
  %v117 = vld [vmem:[%s3 + $0x144] sm:$0xf]
  %v118 = vld [vmem:[%s3 + $0x148] sm:$0xf]
  %v119 = vld [vmem:[%s3 + $0x14c] sm:$0xf]
  %v120 = vld [vmem:[%s3 + $0x150] sm:$0xf]
  %v121 = vld [vmem:[%s3 + $0x154] sm:$0xf]
  %v122 = vld [vmem:[%s3 + $0x158] sm:$0xf]
  %v123 = vld [vmem:[%s3 + $0x15c] sm:$0xf]
  %v124 = vld [vmem:[%s3 + $0x160] sm:$0xf]
  %v125 = vld [vmem:[%s3 + $0x164] sm:$0xf]
  %v126 = vld [vmem:[%s3 + $0x168] sm:$0xf]
  %v127 = vld [vmem:[%s3 + $0x16c] sm:$0xf]
  %v128 = vld [vmem:[%s3 + $0x170] sm:$0xf]
  %v129 = vld [vmem:[%s3 + $0x174] sm:$0xf]
  %v130 = vld [vmem:[%s3 + $0x178] sm:$0xf]
  %v131 = vld [vmem:[%s3 + $0x17c] sm:$0xf]
  %v132 = vld [vmem:[%s4] sm:$0x1]
  %v134 = vperm.slane %v132, 0
  %v139 = vunpack.c.l.b16 %v33
  %v140 = vunpack.c.h.b16 %v33
  %v141 = vunpack.c.l.b16 %v34
  %v142 = vunpack.c.h.b16 %v34
  %v143 = vunpack.c.l.b16 %v35
  %v144 = vunpack.c.h.b16 %v35
  %v145 = vpack.c.b16 %v139, %v139
  %v146 = vpack.c.b16 %v140, %v140
  %v147 = vpack.c.b16 %v141, %v141
  %v148 = vpack.c.b16 %v142, %v142
  %v149 = vpack.c.b16 %v143, %v143
  %v150 = vpack.c.b16 %v144, %v144
  %v253 = vunpack.c.l.b16 %v36
  %v254 = vunpack.c.l.b16 %v37
  %v255 = vunpack.c.l.b16 %v38
  %v256 = vunpack.c.l.b16 %v39
  %v257 = vunpack.c.l.b16 %v40
  %v258 = vunpack.c.l.b16 %v41
  %v259 = vunpack.c.l.b16 %v42
  %v260 = vunpack.c.l.b16 %v43
  %v261 = vunpack.c.l.b16 %v44
  %v262 = vunpack.c.l.b16 %v45
  %v263 = vunpack.c.l.b16 %v46
  %v264 = vunpack.c.l.b16 %v47
  %v265 = vunpack.c.l.b16 %v48
  %v266 = vunpack.c.l.b16 %v49
  %v267 = vunpack.c.l.b16 %v50
  %v268 = vunpack.c.l.b16 %v51
  %v269 = vunpack.c.l.b16 %v52
  %v270 = vunpack.c.l.b16 %v53
  %v271 = vunpack.c.l.b16 %v54
  %v272 = vunpack.c.l.b16 %v55
  %v273 = vunpack.c.l.b16 %v56
  %v274 = vunpack.c.l.b16 %v57
  %v275 = vunpack.c.l.b16 %v58
  %v276 = vunpack.c.l.b16 %v59
  %v277 = vunpack.c.l.b16 %v60
  %v278 = vunpack.c.l.b16 %v61
  %v279 = vunpack.c.l.b16 %v62
  %v280 = vunpack.c.l.b16 %v63
  %v281 = vunpack.c.l.b16 %v64
  %v282 = vunpack.c.l.b16 %v65
  %v283 = vunpack.c.l.b16 %v66
  %v284 = vunpack.c.l.b16 %v67
  %v285 = vunpack.c.l.b16 %v68
  %v286 = vunpack.c.l.b16 %v69
  %v287 = vunpack.c.l.b16 %v70
  %v288 = vunpack.c.l.b16 %v71
  %v289 = vunpack.c.l.b16 %v72
  %v290 = vunpack.c.l.b16 %v73
  %v291 = vunpack.c.l.b16 %v74
  %v292 = vunpack.c.l.b16 %v75
  %v293 = vunpack.c.l.b16 %v76
  %v294 = vunpack.c.l.b16 %v77
  %v295 = vunpack.c.l.b16 %v78
  %v296 = vunpack.c.l.b16 %v79
  %v297 = vunpack.c.l.b16 %v80
  %v298 = vunpack.c.l.b16 %v81
  %v299 = vunpack.c.l.b16 %v82
  %v300 = vunpack.c.l.b16 %v83
  %v301 = vunpack.c.l.b16 %v84
  %v302 = vunpack.c.l.b16 %v85
  %v303 = vunpack.c.l.b16 %v86
  %v304 = vunpack.c.l.b16 %v87
  %v305 = vunpack.c.l.b16 %v88
  %v306 = vunpack.c.l.b16 %v89
  %v307 = vunpack.c.l.b16 %v90
  %v308 = vunpack.c.l.b16 %v91
  %v309 = vunpack.c.l.b16 %v92
  %v310 = vunpack.c.l.b16 %v93
  %v311 = vunpack.c.l.b16 %v94
  %v312 = vunpack.c.l.b16 %v95
  %v313 = vunpack.c.l.b16 %v96
  %v314 = vunpack.c.l.b16 %v97
  %v315 = vunpack.c.l.b16 %v98
  %v316 = vunpack.c.l.b16 %v99
  %v317 = vunpack.c.l.b16 %v100
  %v318 = vunpack.c.l.b16 %v101
  %v319 = vunpack.c.l.b16 %v102
  %v320 = vunpack.c.l.b16 %v103
  %v321 = vunpack.c.l.b16 %v104
  %v322 = vunpack.c.l.b16 %v105
  %v323 = vunpack.c.l.b16 %v106
  %v324 = vunpack.c.l.b16 %v107
  %v325 = vunpack.c.l.b16 %v108
  %v326 = vunpack.c.l.b16 %v109
  %v327 = vunpack.c.l.b16 %v110
  %v328 = vunpack.c.l.b16 %v111
  %v329 = vunpack.c.l.b16 %v112
  %v330 = vunpack.c.l.b16 %v113
  %v331 = vunpack.c.l.b16 %v114
  %v332 = vunpack.c.l.b16 %v115
  %v333 = vunpack.c.l.b16 %v116
  %v334 = vunpack.c.l.b16 %v117
  %v335 = vunpack.c.l.b16 %v118
  %v336 = vunpack.c.l.b16 %v119
  %v337 = vunpack.c.l.b16 %v120
  %v338 = vunpack.c.l.b16 %v121
  %v339 = vunpack.c.l.b16 %v122
  %v340 = vunpack.c.l.b16 %v123
  %v341 = vunpack.c.l.b16 %v124
  %v342 = vunpack.c.l.b16 %v125
  %v343 = vunpack.c.l.b16 %v126
  %v344 = vunpack.c.l.b16 %v127
  %v345 = vunpack.c.l.b16 %v128
  %v346 = vunpack.c.l.b16 %v129
  %v347 = vunpack.c.l.b16 %v130
  %v348 = vunpack.c.l.b16 %v131
  %v349 = vpack.c.b16 %v254, %v253
  %v350 = vpack.c.b16 %v256, %v255
  %v351 = vpack.c.b16 %v258, %v257
  %v352 = vpack.c.b16 %v260, %v259
  %v353 = vpack.c.b16 %v262, %v261
  %v354 = vpack.c.b16 %v264, %v263
  %v355 = vpack.c.b16 %v266, %v265
  %v356 = vpack.c.b16 %v268, %v267
  %v357 = vpack.c.b16 %v270, %v269
  %v358 = vpack.c.b16 %v272, %v271
  %v359 = vpack.c.b16 %v274, %v273
  %v360 = vpack.c.b16 %v276, %v275
  %v361 = vpack.c.b16 %v278, %v277
  %v362 = vpack.c.b16 %v280, %v279
  %v363 = vpack.c.b16 %v282, %v281
  %v364 = vpack.c.b16 %v284, %v283
  %v365 = vpack.c.b16 %v286, %v285
  %v366 = vpack.c.b16 %v288, %v287
  %v367 = vpack.c.b16 %v290, %v289
  %v368 = vpack.c.b16 %v292, %v291
  %v369 = vpack.c.b16 %v294, %v293
  %v370 = vpack.c.b16 %v296, %v295
  %v371 = vpack.c.b16 %v298, %v297
  %v372 = vpack.c.b16 %v300, %v299
  %v373 = vpack.c.b16 %v302, %v301
  %v374 = vpack.c.b16 %v304, %v303
  %v375 = vpack.c.b16 %v306, %v305
  %v376 = vpack.c.b16 %v308, %v307
  %v377 = vpack.c.b16 %v310, %v309
  %v378 = vpack.c.b16 %v312, %v311
  %v379 = vpack.c.b16 %v314, %v313
  %v380 = vpack.c.b16 %v316, %v315
  %v381 = vpack.c.b16 %v318, %v317
  %v382 = vpack.c.b16 %v320, %v319
  %v383 = vpack.c.b16 %v322, %v321
  %v384 = vpack.c.b16 %v324, %v323
  %v385 = vpack.c.b16 %v326, %v325
  %v386 = vpack.c.b16 %v328, %v327
  %v387 = vpack.c.b16 %v330, %v329
  %v388 = vpack.c.b16 %v332, %v331
  %v389 = vpack.c.b16 %v334, %v333
  %v390 = vpack.c.b16 %v336, %v335
  %v391 = vpack.c.b16 %v338, %v337
  %v392 = vpack.c.b16 %v340, %v339
  %v393 = vpack.c.b16 %v342, %v341
  %v394 = vpack.c.b16 %v344, %v343
  %v395 = vpack.c.b16 %v346, %v345
  %v396 = vpack.c.b16 %v348, %v347
  %445 = vmatpush.bf16.msra.mxu0 %v356
  %446 = vmatpush.bf16.msra.mxu0 %v355
  %447 = vmatpush.bf16.msra.mxu0 %v354
  %448 = vmatpush.bf16.msra.mxu0 %v353
  %449 = vmatpush.bf16.msra.mxu0 %v352
  %450 = vmatpush.bf16.msra.mxu0 %v351
  %451 = vmatpush.bf16.msra.mxu0 %v350
  %452 = vmatpush.bf16.msra.mxu0 %v349
  %453 = vmatmul.bf16.gmra.mxu0 %v145
  %v454 = vpop.f32.mrf.mxu0
  %v455 = vadd.f32 %v134, %v454
  %v456 = vpop.f32.mrf.mxu0
  %457 = vdwg.mxu0
  %458 = vmatpush.bf16.msra.mxu0 %v364
  %459 = vmatpush.bf16.msra.mxu0 %v363
  %460 = vmatpush.bf16.msra.mxu0 %v362
  %461 = vmatpush.bf16.msra.mxu0 %v361
  %462 = vmatpush.bf16.msra.mxu0 %v360
  %463 = vmatpush.bf16.msra.mxu0 %v359
  %464 = vmatpush.bf16.msra.mxu0 %v358
  %465 = vmatpush.bf16.msra.mxu0 %v357
  %466 = vmatmul.bf16.gmra.mxu0 %v146
  %v467 = vpop.f32.mrf.mxu0
  %v468 = vadd.f32 %v455, %v467
  %v469 = vpop.f32.mrf.mxu0
  %470 = vdwg.mxu0
  %471 = vmatpush.bf16.msra.mxu0 %v372
  %472 = vmatpush.bf16.msra.mxu0 %v371
  %473 = vmatpush.bf16.msra.mxu0 %v370
  %474 = vmatpush.bf16.msra.mxu0 %v369
  %475 = vmatpush.bf16.msra.mxu0 %v368
  %476 = vmatpush.bf16.msra.mxu0 %v367
  %477 = vmatpush.bf16.msra.mxu0 %v366
  %478 = vmatpush.bf16.msra.mxu0 %v365
  %479 = vmatmul.bf16.gmra.mxu0 %v147
  %v480 = vpop.f32.mrf.mxu0
  %v481 = vadd.f32 %v468, %v480
  %v482 = vpop.f32.mrf.mxu0
  %483 = vdwg.mxu0
  %484 = vmatpush.bf16.msra.mxu0 %v380
  %485 = vmatpush.bf16.msra.mxu0 %v379
  %486 = vmatpush.bf16.msra.mxu0 %v378
  %487 = vmatpush.bf16.msra.mxu0 %v377
  %488 = vmatpush.bf16.msra.mxu0 %v376
  %489 = vmatpush.bf16.msra.mxu0 %v375
  %490 = vmatpush.bf16.msra.mxu0 %v374
  %491 = vmatpush.bf16.msra.mxu0 %v373
  %492 = vmatmul.bf16.gmra.mxu0 %v148
  %v493 = vpop.f32.mrf.mxu0
  %v494 = vadd.f32 %v481, %v493
  %v495 = vpop.f32.mrf.mxu0
  %496 = vdwg.mxu0
  %497 = vmatpush.bf16.msra.mxu0 %v388
  %498 = vmatpush.bf16.msra.mxu0 %v387
  %499 = vmatpush.bf16.msra.mxu0 %v386
  %500 = vmatpush.bf16.msra.mxu0 %v385
  %501 = vmatpush.bf16.msra.mxu0 %v384
  %502 = vmatpush.bf16.msra.mxu0 %v383
  %503 = vmatpush.bf16.msra.mxu0 %v382
  %504 = vmatpush.bf16.msra.mxu0 %v381
  %505 = vmatmul.bf16.gmra.mxu0 %v149
  %v506 = vpop.f32.mrf.mxu0
  %v507 = vadd.f32 %v494, %v506
  %v508 = vpop.f32.mrf.mxu0
  %509 = vdwg.mxu0
  %510 = vmatpush.bf16.msra.mxu0 %v396
  %511 = vmatpush.bf16.msra.mxu0 %v395
  %512 = vmatpush.bf16.msra.mxu0 %v394
  %513 = vmatpush.bf16.msra.mxu0 %v393
  %514 = vmatpush.bf16.msra.mxu0 %v392
  %515 = vmatpush.bf16.msra.mxu0 %v391
  %516 = vmatpush.bf16.msra.mxu0 %v390
  %517 = vmatpush.bf16.msra.mxu0 %v389
  %518 = vmatmul.bf16.gmra.mxu0 %v150
  %v519 = vpop.f32.mrf.mxu0
  %v520 = vadd.f32 %v507, %v519
  %v521 = vpop.f32.mrf.mxu0
  %522 = vdwg.mxu0
  %v523 = vmax.f32 %v520, 0.0
  %v524 = vpack.c.bf16 %v523, %v523
  %v525 = vld [vmem:[%s5] sm:$0xf]
  %v526 = vld [vmem:[%s5 + $0x4] sm:$0xf]
  %v527 = vld [vmem:[%s5 + $0x8] sm:$0xf]
  %v528 = vld [vmem:[%s5 + $0xc] sm:$0xf]
  %v529 = vld [vmem:[%s5 + $0x10] sm:$0xf]
  %v530 = vld [vmem:[%s5 + $0x14] sm:$0xf]
  %v531 = vld [vmem:[%s5 + $0x18] sm:$0xf]
  %v532 = vld [vmem:[%s5 + $0x1c] sm:$0xf]
  %v533 = vld [vmem:[%s6] sm:$0x1]
  %v535 = vperm.slane %v533, 0
  %v545 = vunpack.c.l.b16 %v525
  %v546 = vunpack.c.l.b16 %v526
  %v547 = vunpack.c.l.b16 %v527
  %v548 = vunpack.c.l.b16 %v528
  %v549 = vunpack.c.l.b16 %v529
  %v550 = vunpack.c.l.b16 %v530
  %v551 = vunpack.c.l.b16 %v531
  %v552 = vunpack.c.l.b16 %v532
  %v553 = vpack.c.b16 %v546, %v545
  %v554 = vpack.c.b16 %v548, %v547
  %v555 = vpack.c.b16 %v550, %v549
  %v556 = vpack.c.b16 %v552, %v551
  %vm561 = vcmask 523264
  %v563 = vsel %vm561, %v524, 0
  %565 = vmatpush.bf16.msra.mxu0 0
  %566 = vmatpush.bf16.msra.mxu0 0
  %567 = vmatpush.bf16.msra.mxu0 0
  %568 = vmatpush.bf16.msra.mxu0 0
  %569 = vmatpush.bf16.msra.mxu0 %v556
  %570 = vmatpush.bf16.msra.mxu0 %v555
  %571 = vmatpush.bf16.msra.mxu0 %v554
  %572 = vmatpush.bf16.msra.mxu0 %v553
  %573 = vmatmul.bf16.gmra.mxu0 %v563
  %v574 = vpop.f32.mrf.mxu0
  %v575 = vadd.f32 %v535, %v574
  %v576 = vpop.f32.mrf.mxu0
  %577 = vdwg.mxu0
  %v578 = vmax.f32 %v575, 0.0
  %v579 = vpack.c.bf16 %v578, %v578
  %v580 = vld [vmem:[%s7] sm:$0xf]
  %v581 = vld [vmem:[%s7 + $0x4] sm:$0xf]
  %v582 = vld [vmem:[%s7 + $0x8] sm:$0xf]
  %v583 = vld [vmem:[%s7 + $0xc] sm:$0xf]
  %v584 = vld [vmem:[%s7 + $0x10] sm:$0xf]
  %v585 = vld [vmem:[%s7 + $0x14] sm:$0xf]
  %v586 = vld [vmem:[%s7 + $0x18] sm:$0xf]
  %v587 = vld [vmem:[%s7 + $0x1c] sm:$0xf]
  %v588 = vld [vmem:[%s8] sm:$0x1]
  %v590 = vperm.slane %v588, 0
  %v600 = vunpack.c.l.b16 %v580
  %v601 = vunpack.c.l.b16 %v581
  %v602 = vunpack.c.l.b16 %v582
  %v603 = vunpack.c.l.b16 %v583
  %v604 = vunpack.c.l.b16 %v584
  %v605 = vunpack.c.l.b16 %v585
  %v606 = vunpack.c.l.b16 %v586
  %v607 = vunpack.c.l.b16 %v587
  %v608 = vpack.c.b16 %v601, %v600
  %v609 = vpack.c.b16 %v603, %v602
  %v610 = vpack.c.b16 %v605, %v604
  %v611 = vpack.c.b16 %v607, %v606
  %v617 = vsel %vm561, %v579, 0
  %619 = vmatpush.bf16.msra.mxu0 0
  %620 = vmatpush.bf16.msra.mxu0 0
  %621 = vmatpush.bf16.msra.mxu0 0
  %622 = vmatpush.bf16.msra.mxu0 0
  %623 = vmatpush.bf16.msra.mxu0 %v611
  %624 = vmatpush.bf16.msra.mxu0 %v610
  %625 = vmatpush.bf16.msra.mxu0 %v609
  %626 = vmatpush.bf16.msra.mxu0 %v608
  %627 = vmatmul.bf16.gmra.mxu0 %v617
  %v628 = vpop.f32.mrf.mxu0
  %v629 = vadd.f32 %v590, %v628
  %v630 = vpop.f32.mrf.mxu0
  %631 = vdwg.mxu0
  %v632 = vld [vmem:[%s1] sm:$0xff]
  %v633 = vld [vmem:[%s1 + $0x8] sm:$0xff]
  %v634 = vld [vmem:[%s1 + $0x10] sm:$0xff]
  %v638 = vunpack.c.l.b16 %v632
  %v639 = vunpack.c.h.b16 %v632
  %v640 = vunpack.c.l.b16 %v633
  %v641 = vunpack.c.h.b16 %v633
  %v642 = vunpack.c.l.b16 %v634
  %v643 = vunpack.c.h.b16 %v634
  %v644 = vpack.c.b16 %v638, %v638
  %v645 = vpack.c.b16 %v639, %v639
  %v646 = vpack.c.b16 %v640, %v640
  %v647 = vpack.c.b16 %v641, %v641
  %v648 = vpack.c.b16 %v642, %v642
  %v649 = vpack.c.b16 %v643, %v643
  %656 = vmatpush.bf16.msra.mxu0 %v356
  %657 = vmatpush.bf16.msra.mxu0 %v355
  %658 = vmatpush.bf16.msra.mxu0 %v354
  %659 = vmatpush.bf16.msra.mxu0 %v353
  %660 = vmatpush.bf16.msra.mxu0 %v352
  %661 = vmatpush.bf16.msra.mxu0 %v351
  %662 = vmatpush.bf16.msra.mxu0 %v350
  %663 = vmatpush.bf16.msra.mxu0 %v349
  %664 = vmatmul.bf16.gmra.mxu0 %v644
  %v665 = vpop.f32.mrf.mxu0
  %v666 = vadd.f32 %v134, %v665
  %v667 = vpop.f32.mrf.mxu0
  %668 = vdwg.mxu0
  %669 = vmatpush.bf16.msra.mxu0 %v364
  %670 = vmatpush.bf16.msra.mxu0 %v363
  %671 = vmatpush.bf16.msra.mxu0 %v362
  %672 = vmatpush.bf16.msra.mxu0 %v361
  %673 = vmatpush.bf16.msra.mxu0 %v360
  %674 = vmatpush.bf16.msra.mxu0 %v359
  %675 = vmatpush.bf16.msra.mxu0 %v358
  %676 = vmatpush.bf16.msra.mxu0 %v357
  %677 = vmatmul.bf16.gmra.mxu0 %v645
  %v678 = vpop.f32.mrf.mxu0
  %v679 = vadd.f32 %v666, %v678
  %v680 = vpop.f32.mrf.mxu0
  %681 = vdwg.mxu0
  %682 = vmatpush.bf16.msra.mxu0 %v372
  %683 = vmatpush.bf16.msra.mxu0 %v371
  %684 = vmatpush.bf16.msra.mxu0 %v370
  %685 = vmatpush.bf16.msra.mxu0 %v369
  %686 = vmatpush.bf16.msra.mxu0 %v368
  %687 = vmatpush.bf16.msra.mxu0 %v367
  %688 = vmatpush.bf16.msra.mxu0 %v366
  %689 = vmatpush.bf16.msra.mxu0 %v365
  %690 = vmatmul.bf16.gmra.mxu0 %v646
  %v691 = vpop.f32.mrf.mxu0
  %v692 = vadd.f32 %v679, %v691
  %v693 = vpop.f32.mrf.mxu0
  %694 = vdwg.mxu0
  %695 = vmatpush.bf16.msra.mxu0 %v380
  %696 = vmatpush.bf16.msra.mxu0 %v379
  %697 = vmatpush.bf16.msra.mxu0 %v378
  %698 = vmatpush.bf16.msra.mxu0 %v377
  %699 = vmatpush.bf16.msra.mxu0 %v376
  %700 = vmatpush.bf16.msra.mxu0 %v375
  %701 = vmatpush.bf16.msra.mxu0 %v374
  %702 = vmatpush.bf16.msra.mxu0 %v373
  %703 = vmatmul.bf16.gmra.mxu0 %v647
  %v704 = vpop.f32.mrf.mxu0
  %v705 = vadd.f32 %v692, %v704
  %v706 = vpop.f32.mrf.mxu0
  %707 = vdwg.mxu0
  %708 = vmatpush.bf16.msra.mxu0 %v388
  %709 = vmatpush.bf16.msra.mxu0 %v387
  %710 = vmatpush.bf16.msra.mxu0 %v386
  %711 = vmatpush.bf16.msra.mxu0 %v385
  %712 = vmatpush.bf16.msra.mxu0 %v384
  %713 = vmatpush.bf16.msra.mxu0 %v383
  %714 = vmatpush.bf16.msra.mxu0 %v382
  %715 = vmatpush.bf16.msra.mxu0 %v381
  %716 = vmatmul.bf16.gmra.mxu0 %v648
  %v717 = vpop.f32.mrf.mxu0
  %v718 = vadd.f32 %v705, %v717
  %v719 = vpop.f32.mrf.mxu0
  %720 = vdwg.mxu0
  %721 = vmatpush.bf16.msra.mxu0 %v396
  %722 = vmatpush.bf16.msra.mxu0 %v395
  %723 = vmatpush.bf16.msra.mxu0 %v394
  %724 = vmatpush.bf16.msra.mxu0 %v393
  %725 = vmatpush.bf16.msra.mxu0 %v392
  %726 = vmatpush.bf16.msra.mxu0 %v391
  %727 = vmatpush.bf16.msra.mxu0 %v390
  %728 = vmatpush.bf16.msra.mxu0 %v389
  %729 = vmatmul.bf16.gmra.mxu0 %v649
  %v730 = vpop.f32.mrf.mxu0
  %v731 = vadd.f32 %v718, %v730
  %v732 = vpop.f32.mrf.mxu0
  %733 = vdwg.mxu0
  %v734 = vmax.f32 %v731, 0.0
  %v735 = vpack.c.bf16 %v734, %v734
  %v737 = vsel %vm561, %v735, 0
  %739 = vmatpush.bf16.msra.mxu0 0
  %740 = vmatpush.bf16.msra.mxu0 0
  %741 = vmatpush.bf16.msra.mxu0 0
  %742 = vmatpush.bf16.msra.mxu0 0
  %743 = vmatpush.bf16.msra.mxu0 %v556
  %744 = vmatpush.bf16.msra.mxu0 %v555
  %745 = vmatpush.bf16.msra.mxu0 %v554
  %746 = vmatpush.bf16.msra.mxu0 %v553
  %747 = vmatmul.bf16.gmra.mxu0 %v737
  %v748 = vpop.f32.mrf.mxu0
  %v749 = vadd.f32 %v535, %v748
  %v750 = vpop.f32.mrf.mxu0
  %751 = vdwg.mxu0
  %v752 = vmax.f32 %v749, 0.0
  %v753 = vpack.c.bf16 %v752, %v752
  %v755 = vsel %vm561, %v753, 0
  %757 = vmatpush.bf16.msra.mxu0 0
  %758 = vmatpush.bf16.msra.mxu0 0
  %759 = vmatpush.bf16.msra.mxu0 0
  %760 = vmatpush.bf16.msra.mxu0 0
  %761 = vmatpush.bf16.msra.mxu0 %v611
  %762 = vmatpush.bf16.msra.mxu0 %v610
  %763 = vmatpush.bf16.msra.mxu0 %v609
  %764 = vmatpush.bf16.msra.mxu0 %v608
  %765 = vmatmul.bf16.gmra.mxu0 %v755
  %v766 = vpop.f32.mrf.mxu0
  %v767 = vadd.f32 %v590, %v766
  %v768 = vpop.f32.mrf.mxu0
  %769 = vdwg.mxu0
  %v770 = vlaneseq
  %v771 = vand.u32 %v770, 127
  %v772 = vld [vmem:[%s2] sm:$0xff]
  %773 = vset.pattern.permute.xlu0 0
  %774 = vperm.xlu0 %773, %v772
  %v775 = vpop.permute.xlu0 %774
  %vm776 = vcmp.eq.s32.totalorder %v771, %v775
  %v777 = vsel %vm776, 1, 0
  %v778 = vcvt.s32.f32 %v777
  %vm779 = vcmask 64512
  %v780 = vsel %vm779, %v629, -inf
  %781 = vmax.xlane.f32.xlu0 %v780
  %v782 = vpop.xlane.xlu0 %781
  %v783 = vsub.f32 %v629, %v782
  %v784 = vmul.f32 %v783, 1.442695
  %v785 = vpow.pop %v784
  %v786 = vsel %vm779, %v785, 0.0
  %787 = vadd.xlane.f32.xlu0 %v786
  %v788 = vpop.xlane.xlu0 %787
  %v789 = vlog2.pop %v788
  %v790 = vmul.f32 %v789, 0.6931472
  %v791 = vadd.f32 %v782, %v790
  %v792 = vmul.f32 %v778, %v629
  %v793 = vsel %vm779, %v792, 0.0
  %794 = vadd.xlane.f32.xlu0 %v793
  %v795 = vpop.xlane.xlu0 %794
  %v796 = vsub.f32 %v791, %v795
  %v797 = vrot.slane %v796, 4
  %v798 = vadd.f32 %v796, %v797
  %v799 = vrot.slane %v798, 2
  %v800 = vadd.f32 %v798, %v799
  %v801 = vrot.slane %v800, 1
  %v802 = vadd.f32 %v800, %v801
  %v803 = vmul.f32 %v802, 0.125
  %v804 = vsel %vm779, %v767, -inf
  %805 = vmax.xlane.f32.xlu0 %v804
  %v806 = vpop.xlane.xlu0 %805
  %v807 = vsub.f32 %v767, %v806
  %v808 = vmul.f32 %v807, 1.442695
  %v809 = vpow.pop %v808
  %v810 = vsel %vm779, %v809, 0.0
  %811 = vadd.xlane.f32.xlu0 %v810
  %v812 = vpop.xlane.xlu0 %811
  %v813 = vrcp.pop %v812
  %v814 = vmul.f32 %v809, %v813
  %v815 = vsel %vm779, %v778, 0.0
  %v816 = vrot.slane %v815, 4
  %v817 = vadd.f32 %v815, %v816
  %v818 = vrot.slane %v817, 2
  %v819 = vadd.f32 %v817, %v818
  %v820 = vrot.slane %v819, 1
  %v821 = vadd.f32 %v819, %v820
  %vm822 = vcmp.gt.f32.partialorder %v821, 0.0
  %v823 = vsel %vm822, %v821, 100.0
  %v824 = vrcp.pop %v823
  %v825 = vmul.f32 %v823, %v824
  %v826 = vsub.f32 1.0, %v825
  %v827 = vmul.f32 %v824, %v826
  %v828 = vadd.f32 %v824, %v827
  %vm829 = vweird.f32 %v823
  %vm830 = vweird.f32 %v824
  %vm831 = vmor %vm829, %vm830
  %v832 = vsel %vm831, %v824, %v828
  %v833 = vand.u32 2147483647, %v823
  %vm834 = vcmp.eq.f32.partialorder %v833, 8.507059e+37
  %v835 = vand.u32 %v823, 2147483648
  %v836 = vor.u32 1.1754944e-38, %v835
  %v837 = vsel %vm834, %v836, %v832
  %v838 = vmul.f32 %v778, %v837
  %v839 = vsel %vm779, %v814, 0.0
  %v840 = vrot.slane %v839, 4
  %v841 = vadd.f32 %v839, %v840
  %v842 = vrot.slane %v841, 2
  %v843 = vadd.f32 %v841, %v842
  %v844 = vrot.slane %v843, 1
  %v845 = vadd.f32 %v843, %v844
  %vm846 = vcmp.eq.f32.partialorder %v845, 0.0
  %v847 = vsel %vm846, 100.0, %v845
  %v848 = vrcp.pop %v847
  %v849 = vmul.f32 %v847, %v848
  %v850 = vsub.f32 1.0, %v849
  %v851 = vmul.f32 %v848, %v850
  %v852 = vadd.f32 %v848, %v851
  %vm853 = vweird.f32 %v847
  %vm854 = vweird.f32 %v848
  %vm855 = vmor %vm853, %vm854
  %v856 = vsel %vm855, %v848, %v852
  %v857 = vand.u32 2147483647, %v847
  %vm858 = vcmp.eq.f32.partialorder %v857, 8.507059e+37
  %v859 = vand.u32 %v847, 2147483648
  %v860 = vor.u32 1.1754944e-38, %v859
  %v861 = vsel %vm858, %v860, %v856
  %v862 = vmul.f32 %v814, %v861
  %v863 = vsel %vm779, %v814, -inf
  %864 = vmax.xlane.f32.xlu0 %v863
  %v865 = vpop.xlane.xlu0 %864
  %vm866 = vcmp.eq.f32.partialorder %v814, %v865
  %v867 = vsel %vm866, %v771, 8
  %v868 = vsel %vm779, %v867, 2147483647
  %v869 = vand.u32 %v868, 65535
  %v870 = vshra.s32 %v868, 16
  %v871 = vcvt.s32.f32 %v869
  %v872 = vcvt.s32.f32 %v870
  %873 = vmin.xlane.f32.xlu0 %v872
  %v874 = vpop.xlane.xlu0 %873
  %vm875 = vcmp.eq.f32.partialorder %v872, %v874
  %v876 = vsel %vm875, %v871, inf
  %877 = vmin.xlane.f32.xlu0 %v876
  %v878 = vpop.xlane.xlu0 %877
  %v879 = vcvt.f32.s32 %v878
  %v880 = vcvt.f32.s32 %v874
  %v881 = vshll.u32 %v880, 16
  %v882 = vadd.s32 %v881, %v879
  %vm883 = vcmp.eq.s32.totalorder %v771, %v882
  %v884 = vsel %vm883, 1, 0
  %v885 = vcvt.s32.f32 %v884
  %v886 = vsel %vm779, %v885, 0.0
  %v887 = vrot.slane %v886, 4
  %v888 = vadd.f32 %v886, %v887
  %v889 = vrot.slane %v888, 2
  %v890 = vadd.f32 %v888, %v889
  %v891 = vrot.slane %v890, 1
  %v892 = vadd.f32 %v890, %v891
  %vm893 = vcmp.gt.f32.partialorder %v892, 0.0
  %vm894 = vmand %vm822, %vm893
  %v895 = vsel %vm894, 1, 0
  %v896 = vcvt.s32.f32 %v895
  %v897 = vsel %vm779, %v896, 0.0
  %898 = vadd.xlane.f32.xlu0 %v897
  %v899 = vpop.xlane.xlu0 %898
  %vm900 = vcmp.gt.f32.partialorder %v899, 0.0
  %v901 = vmax.f32 %v899, 1.0
  %v902 = vrcp.pop %v901
  %v903 = vmul.f32 %v901, %v902
  %v904 = vsub.f32 1.0, %v903
  %v905 = vmul.f32 %v902, %v904
  %v906 = vadd.f32 %v902, %v905
  %vm907 = vweird.f32 %v901
  %vm908 = vweird.f32 %v902
  %vm909 = vmor %vm907, %vm908
  %v910 = vsel %vm909, %v902, %v906
  %v911 = vand.u32 2147483647, %v901
  %vm912 = vcmp.eq.f32.partialorder %v911, 8.507059e+37
  %v913 = vand.u32 %v901, 2147483648
  %v914 = vor.u32 1.1754944e-38, %v913
  %v915 = vsel %vm912, %v914, %v910
  %v916 = vmul.f32 1.0, %v915
  %v917 = vsel %vm900, %v916, 0.0
  %v918 = vmul.f32 %v838, %v896
  %v920 = vsel %vm779, %v918, 0
  %v923 = vsel %vm779, %v838, 0
  %925 = vmatpush.xpose.msra.mxu0 0.0
  %926 = vmatpush.xpose.msra.mxu0 0.0
  %927 = vmatpush.xpose.msra.mxu0 0.0
  %928 = vmatpush.xpose.msra.mxu0 0.0
  %929 = vmatpush.xpose.msra.mxu0 0.0
  %930 = vmatpush.xpose.msra.mxu0 0.0
  %931 = vmatpush.xpose.msra.mxu0 0.0
  %932 = vmatpush.xpose.msra.mxu0 0.0
  %933 = vmatpush.xpose.msra.mxu0 0.0
  %934 = vmatpush.xpose.msra.mxu0 0.0
  %935 = vmatpush.xpose.msra.mxu0 0.0
  %936 = vmatpush.xpose.msra.mxu0 0.0
  %937 = vmatpush.xpose.msra.mxu0 0.0
  %938 = vmatpush.xpose.msra.mxu0 0.0
  %939 = vmatpush.xpose.msra.mxu0 0.0
  %940 = vmatpush.xpose.msra.mxu0 %v923
  %941 = vmatmul.f32.gmra.mxu0 %v920
  %v942 = vpop.f32.mrf.mxu0
  %v943 = vadd.f32 0.0, %v942
  %944 = vdwg.mxu0
  %v945 = vmul.f32 %v943, %v917
  %v946 = vmul.f32 %v862, %v896
  %v948 = vsel %vm779, %v946, 0
  %v951 = vsel %vm779, %v862, 0
  %953 = vmatpush.xpose.msra.mxu0 0.0
  %954 = vmatpush.xpose.msra.mxu0 0.0
  %955 = vmatpush.xpose.msra.mxu0 0.0
  %956 = vmatpush.xpose.msra.mxu0 0.0
  %957 = vmatpush.xpose.msra.mxu0 0.0
  %958 = vmatpush.xpose.msra.mxu0 0.0
  %959 = vmatpush.xpose.msra.mxu0 0.0
  %960 = vmatpush.xpose.msra.mxu0 0.0
  %961 = vmatpush.xpose.msra.mxu0 0.0
  %962 = vmatpush.xpose.msra.mxu0 0.0
  %963 = vmatpush.xpose.msra.mxu0 0.0
  %964 = vmatpush.xpose.msra.mxu0 0.0
  %965 = vmatpush.xpose.msra.mxu0 0.0
  %966 = vmatpush.xpose.msra.mxu0 0.0
  %967 = vmatpush.xpose.msra.mxu0 0.0
  %968 = vmatpush.xpose.msra.mxu0 %v951
  %969 = vmatmul.f32.gmra.mxu0 %v948
  %v970 = vpop.f32.mrf.mxu0
  %v971 = vadd.f32 0.0, %v970
  %972 = vdwg.mxu0
  %v973 = vmul.f32 %v971, %v917
  %974 = vmatpush.xpose.msra.mxu0 0.0
  %975 = vmatpush.xpose.msra.mxu0 0.0
  %976 = vmatpush.xpose.msra.mxu0 0.0
  %977 = vmatpush.xpose.msra.mxu0 0.0
  %978 = vmatpush.xpose.msra.mxu0 0.0
  %979 = vmatpush.xpose.msra.mxu0 0.0
  %980 = vmatpush.xpose.msra.mxu0 0.0
  %981 = vmatpush.xpose.msra.mxu0 0.0
  %982 = vmatpush.xpose.msra.mxu0 0.0
  %983 = vmatpush.xpose.msra.mxu0 0.0
  %984 = vmatpush.xpose.msra.mxu0 0.0
  %985 = vmatpush.xpose.msra.mxu0 0.0
  %986 = vmatpush.xpose.msra.mxu0 0.0
  %987 = vmatpush.xpose.msra.mxu0 0.0
  %988 = vmatpush.xpose.msra.mxu0 0.0
  %989 = vmatpush.xpose.msra.mxu0 %v951
  %990 = vmatmul.f32.gmra.mxu0 %v920
  %v991 = vpop.f32.mrf.mxu0
  %v992 = vadd.f32 0.0, %v991
  %993 = vdwg.mxu0
  %v994 = vmul.f32 %v992, %v917
  %v995 = vmul.f32 %v578, %v578
  %v996 = vsel %vm561, %v995, 0.0
  %997 = vadd.xlane.f32.xlu0 %v996
  %v998 = vpop.xlane.xlu0 %997
  %v999 = vmul.f32 %v752, %v752
  %v1000 = vsel %vm561, %v999, 0.0
  %1001 = vadd.xlane.f32.xlu0 %v1000
  %v1002 = vpop.xlane.xlu0 %1001
  %1003 = vxpose.xlu0.b32.start [1/16] %v998, 128
  %1004 = vxpose.xlu0.b32.cont [2/16] 0.0, 128
  %1005 = vxpose.xlu0.b32.cont [3/16] 0.0, 128
  %1006 = vxpose.xlu0.b32.cont [4/16] 0.0, 128
  %1007 = vxpose.xlu0.b32.cont [5/16] 0.0, 128
  %1008 = vxpose.xlu0.b32.cont [6/16] 0.0, 128
  %1009 = vxpose.xlu0.b32.cont [7/16] 0.0, 128
  %1010 = vxpose.xlu0.b32.cont [8/16] 0.0, 128
  %1011 = vxpose.xlu0.b32.cont [9/16] 0.0, 128
  %1012 = vxpose.xlu0.b32.cont [10/16] 0.0, 128
  %1013 = vxpose.xlu0.b32.cont [11/16] 0.0, 128
  %1014 = vxpose.xlu0.b32.cont [12/16] 0.0, 128
  %1015 = vxpose.xlu0.b32.cont [13/16] 0.0, 128
  %1016 = vxpose.xlu0.b32.cont [14/16] 0.0, 128
  %1017 = vxpose.xlu0.b32.cont [15/16] 0.0, 128
  %1018 = vxpose.xlu0.b32.end [16/16] 0.0, 128
  %v1019 = vpop.trf.xlu0
  %v1020 = vpop.trf.xlu0
  %v1021 = vpop.trf.xlu0
  %v1022 = vpop.trf.xlu0
  %v1023 = vpop.trf.xlu0
  %v1024 = vpop.trf.xlu0
  %v1025 = vpop.trf.xlu0
  %v1026 = vpop.trf.xlu0
  %v1027 = vpop.trf.xlu0
  %v1028 = vpop.trf.xlu0
  %v1029 = vpop.trf.xlu0
  %v1030 = vpop.trf.xlu0
  %v1031 = vpop.trf.xlu0
  %v1032 = vpop.trf.xlu0
  %v1033 = vpop.trf.xlu0
  %v1034 = vpop.trf.xlu0
  %v1035 = vperm.slane %v1019, 0
  %v1036 = vadd.f32 %v998, %v1035
  %v1038 = vsel %vm561, %v578, 0
  %1040 = vmatpush.xpose.msra.mxu0 0.0
  %1041 = vmatpush.xpose.msra.mxu0 0.0
  %1042 = vmatpush.xpose.msra.mxu0 0.0
  %1043 = vmatpush.xpose.msra.mxu0 0.0
  %1044 = vmatpush.xpose.msra.mxu0 0.0
  %1045 = vmatpush.xpose.msra.mxu0 0.0
  %1046 = vmatpush.xpose.msra.mxu0 0.0
  %1047 = vmatpush.xpose.msra.mxu0 0.0
  %1048 = vmatpush.xpose.msra.mxu0 0.0
  %1049 = vmatpush.xpose.msra.mxu0 0.0
  %1050 = vmatpush.xpose.msra.mxu0 0.0
  %1051 = vmatpush.xpose.msra.mxu0 0.0
  %1052 = vmatpush.xpose.msra.mxu0 0.0
  %1053 = vmatpush.xpose.msra.mxu0 0.0
  %1054 = vmatpush.xpose.msra.mxu0 0.0
  %1055 = vmatpush.xpose.msra.mxu0 %v1038
  %1056 = vmatmul.f32.gmra.mxu0 %v1038
  %v1057 = vpop.f32.mrf.mxu0
  %v1058 = vadd.f32 0.0, %v1057
  %1059 = vdwg.mxu0
  %v1060 = vmul.f32 %v1058, 2.0
  %v1061 = vsub.f32 %v1036, %v1060
  %v1062 = vmax.f32 %v1061, 0.0
  %1063 = vxpose.xlu0.b32.start [1/16] %v1002, 128
  %1064 = vxpose.xlu0.b32.cont [2/16] 0.0, 128
  %1065 = vxpose.xlu0.b32.cont [3/16] 0.0, 128
  %1066 = vxpose.xlu0.b32.cont [4/16] 0.0, 128
  %1067 = vxpose.xlu0.b32.cont [5/16] 0.0, 128
  %1068 = vxpose.xlu0.b32.cont [6/16] 0.0, 128
  %1069 = vxpose.xlu0.b32.cont [7/16] 0.0, 128
  %1070 = vxpose.xlu0.b32.cont [8/16] 0.0, 128
  %1071 = vxpose.xlu0.b32.cont [9/16] 0.0, 128
  %1072 = vxpose.xlu0.b32.cont [10/16] 0.0, 128
  %1073 = vxpose.xlu0.b32.cont [11/16] 0.0, 128
  %1074 = vxpose.xlu0.b32.cont [12/16] 0.0, 128
  %1075 = vxpose.xlu0.b32.cont [13/16] 0.0, 128
  %1076 = vxpose.xlu0.b32.cont [14/16] 0.0, 128
  %1077 = vxpose.xlu0.b32.cont [15/16] 0.0, 128
  %1078 = vxpose.xlu0.b32.end [16/16] 0.0, 128
  %v1079 = vpop.trf.xlu0
  %v1080 = vpop.trf.xlu0
  %v1081 = vpop.trf.xlu0
  %v1082 = vpop.trf.xlu0
  %v1083 = vpop.trf.xlu0
  %v1084 = vpop.trf.xlu0
  %v1085 = vpop.trf.xlu0
  %v1086 = vpop.trf.xlu0
  %v1087 = vpop.trf.xlu0
  %v1088 = vpop.trf.xlu0
  %v1089 = vpop.trf.xlu0
  %v1090 = vpop.trf.xlu0
  %v1091 = vpop.trf.xlu0
  %v1092 = vpop.trf.xlu0
  %v1093 = vpop.trf.xlu0
  %v1094 = vpop.trf.xlu0
  %v1095 = vperm.slane %v1079, 0
  %v1096 = vadd.f32 %v1002, %v1095
  %v1098 = vsel %vm561, %v752, 0
  %1100 = vmatpush.xpose.msra.mxu0 0.0
  %1101 = vmatpush.xpose.msra.mxu0 0.0
  %1102 = vmatpush.xpose.msra.mxu0 0.0
  %1103 = vmatpush.xpose.msra.mxu0 0.0
  %1104 = vmatpush.xpose.msra.mxu0 0.0
  %1105 = vmatpush.xpose.msra.mxu0 0.0
  %1106 = vmatpush.xpose.msra.mxu0 0.0
  %1107 = vmatpush.xpose.msra.mxu0 0.0
  %1108 = vmatpush.xpose.msra.mxu0 0.0
  %1109 = vmatpush.xpose.msra.mxu0 0.0
  %1110 = vmatpush.xpose.msra.mxu0 0.0
  %1111 = vmatpush.xpose.msra.mxu0 0.0
  %1112 = vmatpush.xpose.msra.mxu0 0.0
  %1113 = vmatpush.xpose.msra.mxu0 0.0
  %1114 = vmatpush.xpose.msra.mxu0 0.0
  %1115 = vmatpush.xpose.msra.mxu0 %v1098
  %1116 = vmatmul.f32.gmra.mxu0 %v1098
  %v1117 = vpop.f32.mrf.mxu0
  %v1118 = vadd.f32 0.0, %v1117
  %1119 = vdwg.mxu0
  %v1120 = vmul.f32 %v1118, 2.0
  %v1121 = vsub.f32 %v1096, %v1120
  %v1122 = vmax.f32 %v1121, 0.0
  %v1123 = vadd.f32 %v998, %v1095
  %1124 = vmatpush.xpose.msra.mxu0 0.0
  %1125 = vmatpush.xpose.msra.mxu0 0.0
  %1126 = vmatpush.xpose.msra.mxu0 0.0
  %1127 = vmatpush.xpose.msra.mxu0 0.0
  %1128 = vmatpush.xpose.msra.mxu0 0.0
  %1129 = vmatpush.xpose.msra.mxu0 0.0
  %1130 = vmatpush.xpose.msra.mxu0 0.0
  %1131 = vmatpush.xpose.msra.mxu0 0.0
  %1132 = vmatpush.xpose.msra.mxu0 0.0
  %1133 = vmatpush.xpose.msra.mxu0 0.0
  %1134 = vmatpush.xpose.msra.mxu0 0.0
  %1135 = vmatpush.xpose.msra.mxu0 0.0
  %1136 = vmatpush.xpose.msra.mxu0 0.0
  %1137 = vmatpush.xpose.msra.mxu0 0.0
  %1138 = vmatpush.xpose.msra.mxu0 0.0
  %1139 = vmatpush.xpose.msra.mxu0 %v1098
  %1140 = vmatmul.f32.gmra.mxu0 %v1038
  %v1141 = vpop.f32.mrf.mxu0
  %v1142 = vadd.f32 0.0, %v1141
  %1143 = vdwg.mxu0
  %v1144 = vmul.f32 %v1142, 2.0
  %v1145 = vsub.f32 %v1123, %v1144
  %v1146 = vmax.f32 %v1145, 0.0
  %v1147 = vsel %vm779, %v1062, 0.0
  %1148 = vadd.xlane.f32.xlu0 %v1147
  %v1149 = vpop.xlane.xlu0 %1148
  %v1150 = vrot.slane %v1149, 4
  %v1151 = vadd.f32 %v1149, %v1150
  %v1152 = vrot.slane %v1151, 2
  %v1153 = vadd.f32 %v1151, %v1152
  %v1154 = vrot.slane %v1153, 1
  %v1155 = vadd.f32 %v1153, %v1154
  %v1156 = vsel %vm779, %v1122, 0.0
  %1157 = vadd.xlane.f32.xlu0 %v1156
  %v1158 = vpop.xlane.xlu0 %1157
  %v1159 = vrot.slane %v1158, 4
  %v1160 = vadd.f32 %v1158, %v1159
  %v1161 = vrot.slane %v1160, 2
  %v1162 = vadd.f32 %v1160, %v1161
  %v1163 = vrot.slane %v1162, 1
  %v1164 = vadd.f32 %v1162, %v1163
  %v1165 = vadd.f32 %v1155, %v1164
  %v1166 = vsel %vm779, %v1146, 0.0
  %1167 = vadd.xlane.f32.xlu0 %v1166
  %v1168 = vpop.xlane.xlu0 %1167
  %v1169 = vrot.slane %v1168, 4
  %v1170 = vadd.f32 %v1168, %v1169
  %v1171 = vrot.slane %v1170, 2
  %v1172 = vadd.f32 %v1170, %v1171
  %v1173 = vrot.slane %v1172, 1
  %v1174 = vadd.f32 %v1172, %v1173
  %v1175 = vmul.f32 %v1174, 2.0
  %v1176 = vadd.f32 %v1165, %v1175
  %v1177 = vmul.f32 %v1176, 0.004166667
  %v1178 = vmul.f32 %v1177, 0.25
  %v1179 = vrcp.pop %v1178
  %v1180 = vmul.f32 %v1178, %v1179
  %v1181 = vsub.f32 1.0, %v1180
  %v1182 = vmul.f32 %v1179, %v1181
  %v1183 = vadd.f32 %v1179, %v1182
  %vm1184 = vweird.f32 %v1178
  %vm1185 = vweird.f32 %v1179
  %vm1186 = vmor %vm1184, %vm1185
  %v1187 = vsel %vm1186, %v1179, %v1183
  %v1188 = vand.u32 2147483647, %v1178
  %vm1189 = vcmp.eq.f32.partialorder %v1188, 8.507059e+37
  %v1190 = vand.u32 %v1178, 2147483648
  %v1191 = vor.u32 1.1754944e-38, %v1190
  %v1192 = vsel %vm1189, %v1191, %v1187
  %v1193 = vmul.f32 1.0, %v1192
  %v1194 = vlaneseq
  %v1195 = vshrl.u32 %v1194, 7
  %vm1196 = vcmp.eq.s32.totalorder %v771, %v1195
  %v1197 = vsel %vm1196, 1, 0
  %v1198 = vcvt.s32.f32 %v1197
  %v1199 = vadd.f32 %v1198, 0.0
  %v1200 = vadd.s32 %v1195, 8
  %vm1201 = vcmp.eq.s32.totalorder %v771, %v1200
  %v1202 = vsel %vm1201, 1, 0
  %v1203 = vcvt.s32.f32 %v1202
  %v1204 = vadd.f32 %v1199, %v1203
  %v1205 = vmul.f32 %v1203, 0.5
  %v1206 = vadd.f32 %v1199, %v1205
  %v1207 = vadd.s32 %v1195, 16
  %vm1208 = vcmp.eq.s32.totalorder %v771, %v1207
  %v1209 = vsel %vm1208, 1, 0
  %v1210 = vcvt.s32.f32 %v1209
  %v1211 = vadd.f32 %v1204, %v1210
  %v1212 = vmul.f32 %v1210, 0.25
  %v1213 = vadd.f32 %v1206, %v1212
  %v1214 = vadd.s32 %v1195, 24
  %vm1215 = vcmp.eq.s32.totalorder %v771, %v1214
  %v1216 = vsel %vm1215, 1, 0
  %v1217 = vcvt.s32.f32 %v1216
  %v1218 = vadd.f32 %v1211, %v1217
  %v1219 = vmul.f32 %v1217, 0.125
  %v1220 = vadd.f32 %v1213, %v1219
  %v1221 = vadd.s32 %v1195, 32
  %vm1222 = vcmp.eq.s32.totalorder %v771, %v1221
  %v1223 = vsel %vm1222, 1, 0
  %v1224 = vcvt.s32.f32 %v1223
  %v1225 = vadd.f32 %v1218, %v1224
  %v1226 = vmul.f32 %v1224, 0.0625
  %v1227 = vadd.f32 %v1220, %v1226
  %v1229 = vsel %vm779, %v1062, 0
  %1231 = vmatpush.msra.mxu0 0.0
  %1232 = vmatpush.msra.mxu0 0.0
  %1233 = vmatpush.msra.mxu0 0.0
  %1234 = vmatpush.msra.mxu0 0.0
  %1235 = vmatpush.msra.mxu0 0.0
  %1236 = vmatpush.msra.mxu0 0.0
  %1237 = vmatpush.msra.mxu0 0.0
  %1238 = vmatpush.msra.mxu0 0.0
  %1239 = vmatpush.msra.mxu0 0.0
  %1240 = vmatpush.msra.mxu0 0.0
  %1241 = vmatpush.msra.mxu0 0.0
  %1242 = vmatpush.msra.mxu0 0.0
  %1243 = vmatpush.msra.mxu0 0.0
  %1244 = vmatpush.msra.mxu0 0.0
  %1245 = vmatpush.msra.mxu0 0.0
  %1246 = vmatpush.msra.mxu0 %v1227
  %1247 = vmatmul.f32.gmra.mxu0 %v1229
  %v1248 = vpop.f32.mrf.mxu0
  %v1249 = vadd.f32 0.0, %v1248
  %1250 = vdwg.mxu0
  %v1251 = vsub.f32 0.0, %v1249
  %v1252 = vmul.f32 %v1251, %v1193
  %v1253 = vmul.f32 %v1252, 1.442695
  %v1254 = vpow.pop %v1253
  %v1256 = vsel %vm779, %v945, 0
  %1258 = vmatpush.msra.mxu0 0.0
  %1259 = vmatpush.msra.mxu0 0.0
  %1260 = vmatpush.msra.mxu0 0.0
  %1261 = vmatpush.msra.mxu0 0.0
  %1262 = vmatpush.msra.mxu0 0.0
  %1263 = vmatpush.msra.mxu0 0.0
  %1264 = vmatpush.msra.mxu0 0.0
  %1265 = vmatpush.msra.mxu0 0.0
  %1266 = vmatpush.msra.mxu0 0.0
  %1267 = vmatpush.msra.mxu0 0.0
  %1268 = vmatpush.msra.mxu0 0.0
  %1269 = vmatpush.msra.mxu0 0.0
  %1270 = vmatpush.msra.mxu0 0.0
  %1271 = vmatpush.msra.mxu0 0.0
  %1272 = vmatpush.msra.mxu0 0.0
  %1273 = vmatpush.msra.mxu0 %v1225
  %1274 = vmatmul.f32.gmra.mxu0 %v1256
  %v1275 = vpop.f32.mrf.mxu0
  %v1276 = vadd.f32 0.0, %v1275
  %1277 = vdwg.mxu0
  %v1278 = vmul.f32 %v1276, %v1254
  %vm1279 = vcmask 326656
  %v1280 = vsel %vm1279, %v1278, 0.0
  %1281 = vadd.xlane.f32.xlu0 %v1280
  %v1282 = vpop.xlane.xlu0 %1281
  %v1283 = vrot.slane %v1282, 4
  %v1284 = vadd.f32 %v1282, %v1283
  %v1285 = vrot.slane %v1284, 2
  %v1286 = vadd.f32 %v1284, %v1285
  %v1287 = vrot.slane %v1286, 1
  %v1288 = vadd.f32 %v1286, %v1287
  %v1290 = vsel %vm779, %v1122, 0
  %1292 = vmatpush.msra.mxu0 0.0
  %1293 = vmatpush.msra.mxu0 0.0
  %1294 = vmatpush.msra.mxu0 0.0
  %1295 = vmatpush.msra.mxu0 0.0
  %1296 = vmatpush.msra.mxu0 0.0
  %1297 = vmatpush.msra.mxu0 0.0
  %1298 = vmatpush.msra.mxu0 0.0
  %1299 = vmatpush.msra.mxu0 0.0
  %1300 = vmatpush.msra.mxu0 0.0
  %1301 = vmatpush.msra.mxu0 0.0
  %1302 = vmatpush.msra.mxu0 0.0
  %1303 = vmatpush.msra.mxu0 0.0
  %1304 = vmatpush.msra.mxu0 0.0
  %1305 = vmatpush.msra.mxu0 0.0
  %1306 = vmatpush.msra.mxu0 0.0
  %1307 = vmatpush.msra.mxu0 %v1227
  %1308 = vmatmul.f32.gmra.mxu0 %v1290
  %v1309 = vpop.f32.mrf.mxu0
  %v1310 = vadd.f32 0.0, %v1309
  %1311 = vdwg.mxu0
  %v1312 = vsub.f32 0.0, %v1310
  %v1313 = vmul.f32 %v1312, %v1193
  %v1314 = vmul.f32 %v1313, 1.442695
  %v1315 = vpow.pop %v1314
  %v1317 = vsel %vm779, %v973, 0
  %1319 = vmatpush.msra.mxu0 0.0
  %1320 = vmatpush.msra.mxu0 0.0
  %1321 = vmatpush.msra.mxu0 0.0
  %1322 = vmatpush.msra.mxu0 0.0
  %1323 = vmatpush.msra.mxu0 0.0
  %1324 = vmatpush.msra.mxu0 0.0
  %1325 = vmatpush.msra.mxu0 0.0
  %1326 = vmatpush.msra.mxu0 0.0
  %1327 = vmatpush.msra.mxu0 0.0
  %1328 = vmatpush.msra.mxu0 0.0
  %1329 = vmatpush.msra.mxu0 0.0
  %1330 = vmatpush.msra.mxu0 0.0
  %1331 = vmatpush.msra.mxu0 0.0
  %1332 = vmatpush.msra.mxu0 0.0
  %1333 = vmatpush.msra.mxu0 0.0
  %1334 = vmatpush.msra.mxu0 %v1225
  %1335 = vmatmul.f32.gmra.mxu0 %v1317
  %v1336 = vpop.f32.mrf.mxu0
  %v1337 = vadd.f32 0.0, %v1336
  %1338 = vdwg.mxu0
  %v1339 = vmul.f32 %v1337, %v1315
  %v1340 = vsel %vm1279, %v1339, 0.0
  %1341 = vadd.xlane.f32.xlu0 %v1340
  %v1342 = vpop.xlane.xlu0 %1341
  %v1343 = vrot.slane %v1342, 4
  %v1344 = vadd.f32 %v1342, %v1343
  %v1345 = vrot.slane %v1344, 2
  %v1346 = vadd.f32 %v1344, %v1345
  %v1347 = vrot.slane %v1346, 1
  %v1348 = vadd.f32 %v1346, %v1347
  %v1350 = vsel %vm779, %v1146, 0
  %1352 = vmatpush.msra.mxu0 0.0
  %1353 = vmatpush.msra.mxu0 0.0
  %1354 = vmatpush.msra.mxu0 0.0
  %1355 = vmatpush.msra.mxu0 0.0
  %1356 = vmatpush.msra.mxu0 0.0
  %1357 = vmatpush.msra.mxu0 0.0
  %1358 = vmatpush.msra.mxu0 0.0
  %1359 = vmatpush.msra.mxu0 0.0
  %1360 = vmatpush.msra.mxu0 0.0
  %1361 = vmatpush.msra.mxu0 0.0
  %1362 = vmatpush.msra.mxu0 0.0
  %1363 = vmatpush.msra.mxu0 0.0
  %1364 = vmatpush.msra.mxu0 0.0
  %1365 = vmatpush.msra.mxu0 0.0
  %1366 = vmatpush.msra.mxu0 0.0
  %1367 = vmatpush.msra.mxu0 %v1227
  %1368 = vmatmul.f32.gmra.mxu0 %v1350
  %v1369 = vpop.f32.mrf.mxu0
  %v1370 = vadd.f32 0.0, %v1369
  %1371 = vdwg.mxu0
  %v1372 = vsub.f32 0.0, %v1370
  %v1373 = vmul.f32 %v1372, %v1193
  %v1374 = vmul.f32 %v1373, 1.442695
  %v1375 = vpow.pop %v1374
  %v1377 = vsel %vm779, %v994, 0
  %1379 = vmatpush.msra.mxu0 0.0
  %1380 = vmatpush.msra.mxu0 0.0
  %1381 = vmatpush.msra.mxu0 0.0
  %1382 = vmatpush.msra.mxu0 0.0
  %1383 = vmatpush.msra.mxu0 0.0
  %1384 = vmatpush.msra.mxu0 0.0
  %1385 = vmatpush.msra.mxu0 0.0
  %1386 = vmatpush.msra.mxu0 0.0
  %1387 = vmatpush.msra.mxu0 0.0
  %1388 = vmatpush.msra.mxu0 0.0
  %1389 = vmatpush.msra.mxu0 0.0
  %1390 = vmatpush.msra.mxu0 0.0
  %1391 = vmatpush.msra.mxu0 0.0
  %1392 = vmatpush.msra.mxu0 0.0
  %1393 = vmatpush.msra.mxu0 0.0
  %1394 = vmatpush.msra.mxu0 %v1225
  %1395 = vmatmul.f32.gmra.mxu0 %v1377
  %v1396 = vpop.f32.mrf.mxu0
  %v1397 = vadd.f32 0.0, %v1396
  %1398 = vdwg.mxu0
  %v1399 = vmul.f32 %v1397, %v1375
  %v1400 = vsel %vm1279, %v1399, 0.0
  %1401 = vadd.xlane.f32.xlu0 %v1400
  %v1402 = vpop.xlane.xlu0 %1401
  %v1403 = vrot.slane %v1402, 4
  %v1404 = vadd.f32 %v1402, %v1403
  %v1405 = vrot.slane %v1404, 2
  %v1406 = vadd.f32 %v1404, %v1405
  %v1407 = vrot.slane %v1406, 1
  %v1408 = vadd.f32 %v1406, %v1407
  %vm1409 = vcmp.ne.f32.partialorder %v1254, %v1254
  %v1410 = vsel %vm1409, 1.0, 0.0
  %vm1411 = vcmp.ne.f32.partialorder %v1315, %v1315
  %v1412 = vsel %vm1411, 1.0, 0.0
  %vm1413 = vcmp.ne.f32.partialorder %v1375, %v1375
  %v1414 = vsel %vm1413, 1.0, 0.0
  %v1415 = vmax.f32 %v1412, %v1414
  %v1416 = vmax.f32 %v1410, %v1415
  %v1417 = vsel %vm1279, %v1416, -inf
  %1418 = vmax.xlane.f32.xlu0 %v1417
  %v1419 = vpop.xlane.xlu0 %1418
  %v1420 = vrot.slane %v1419, 4
  %v1421 = vmax.f32 %v1419, %v1420
  %v1422 = vrot.slane %v1421, 2
  %v1423 = vmax.f32 %v1421, %v1422
  %v1424 = vrot.slane %v1423, 1
  %v1425 = vmax.f32 %v1423, %v1424
  %vm1426 = vcmp.gt.f32.partialorder %v1425, 0.0
  %v1427 = vadd.f32 %v1288, %v1348
  %v1428 = vmul.f32 %v1408, 2.0
  %v1429 = vsub.f32 %v1427, %v1428
  %v1430 = vsel %vm1426, 0.0, %v1429
  %vm1431 = vcmp.eq.s32.totalorder %v771, 0
  %v1432 = vsel %vm1431, %v803, %v1430
  %vm1433 = vcmask 8192
  %1434 = vst.msk [vmem:[%s9] sm:$0x1] %vm1433, %v1432
  // Predicated region
  $region38: #{_deepda_forward.1} parent=0 // pred_check
    _
  $region39: #{_deepda_forward.1} parent=0 // pred_check_branch
    %1436 = sbr.rel (0) target = $region41
  $region40: #{_deepda_forward.1} parent=0 // pred_region
    _
  $region41: #{_deepda_forward.1} parent=0 // pred_fallthru
    _
  // Predicated region
  $region42: #{_deepda_forward.1} parent=0 // pred_check
    _
  $region43: #{_deepda_forward.1} parent=0 // pred_check_branch
    %1438 = sbr.rel (0) target = $region45
  $region44: #{_deepda_forward.1} parent=0 // pred_region
    _
  $region45: #{_deepda_forward.1} parent=0 // pred_fallthru
    _

</llo_original>
